<compile_context>
chip_gen: v7x
topology: tpu7x:2x2x1
jax: 0.10.0
libtpu: 0.0.40
codegen_flags: <defaults>
</compile_context>

<pallas_src>
import functools

import numpy as np
import jax
import jax.numpy as jnp
from jax.experimental import pallas as pl
from jax.experimental.pallas import tpu as pltpu

EPS = 1e-5


def _resblock_kernel(x_ref, b1_ref, g1_ref, be1_ref, b2_ref, g2_ref, be2_ref,
                     m_ref, out_ref, xpad_ref, *, N, H, W):
    """Whole ResBlock forward on one VMEM-resident, lane-dense tile.

    x_ref    : (N*H, W*C)        f32  flattened-NHWC activations (lane-dense)
    b*_ref   : (3, W*C, W*C)     f32  per-dy block-Toeplitz conv weights
    g*/be*   : (1, W*C)          f32  BN gamma / beta, pre-tiled over W
    m_ref    : (W*C, W*C)        f32  channel-match selector (folds W groups)
    out_ref  : (N*H, W*C)        f32
    xpad_ref : (N*(H+2), W*C)    f32  VMEM scratch, vertical halo only
    """
    NH, WC = x_ref.shape
    inv_r = 1.0 / (N * H * W)

    x = x_ref[...]                      # (NH, WC) full-lane load
    m = m_ref[...]                      # (WC, WC) hoisted selector
    ones_row = jnp.ones((1, NH), jnp.float32)

    # One full-lane memset of the tiny padded scratch (border rows stay zero;
    # interior rows are overwritten per stage).
    xpad_ref[...] = jnp.zeros(xpad_ref.shape, jnp.float32)

    def write_interior(rows):
        # rows: (NH, WC); image n occupies padded rows n*(H+2)+1 .. n*(H+2)+H.
        for n in range(N):
            xpad_ref[pl.ds(n * (H + 2) + 1, H), :] = rows[n * H:(n + 1) * H, :]

    def conv3x3(b_ref):
        # 3 per-dy block-Toeplitz matmuls; horizontal zero padding is baked
        # into the banded weight matrix, vertical padding comes from the
        # zero halo rows of the scratch.
        acc = jnp.zeros((NH, WC), jnp.float32)
        for dy in range(3):
            lhs = jnp.concatenate(
                [xpad_ref[pl.ds(n * (H + 2) + dy, H), :] for n in range(N)],
                axis=0)                                         # (NH, WC)
            acc = acc + jnp.dot(lhs, b_ref[dy],
                                preferred_element_type=jnp.float32)
        return acc

    def bn_train(y, gamma_t, beta_t):
        # PyTorch training-mode BatchNorm2d (biased batch stats over N,H,W).
        # Reductions run on the MXU: ones-row matmul sums over rows, the
        # channel-match selector folds the W lane-groups and re-tiles the
        # per-channel result back to (1, W*C) — no XLU passes, no reshapes.
        rowsum = jnp.dot(ones_row, y, preferred_element_type=jnp.float32)
        mean_t = jnp.dot(rowsum, m, preferred_element_type=jnp.float32) * inv_r
        d = y - mean_t
        rowsq = jnp.dot(ones_row, d * d, preferred_element_type=jnp.float32)
        var_t = jnp.dot(rowsq, m, preferred_element_type=jnp.float32) * inv_r
        scale_t = gamma_t * jax.lax.rsqrt(var_t + EPS)          # EUP rsqrt
        return d * scale_t + beta_t

    # ---- stage 1: pad(x) -> conv1 -> bn1 -> relu ----
    # (conv bias omitted: it cancels exactly under training-mode BN)
    write_interior(x)
    h = jnp.maximum(bn_train(conv3x3(b1_ref), g1_ref[...], be1_ref[...]), 0.0)

    # ---- stage 2: pad(h) -> conv2 -> bn2 -> +residual -> relu ----
    write_interior(h)
    h2 = bn_train(conv3x3(b2_ref), g2_ref[...], be2_ref[...]) + x
    out_ref[...] = jnp.maximum(h2, 0.0)      # full-lane (NH, WC) store


def prepare_resblock_params(params, *, W):
    """One-time weight re-pack; hoist this out of the per-call path.

    Conv OIHW weights -> 3 per-dy block-Toeplitz matrices of shape
    (W*C_in, W*C_out): entry [(w_in, ci), (w_out, co)] = weight[co, ci, dy, dx]
    where dx = w_in - w_out + 1 in {0,1,2} (zero elsewhere -> horizontal
    zero padding is implicit).  gamma/beta are tiled to (1, W*C).  A
    channel-match selector matrix folds the W lane-groups for BN stats.
    Conv biases are intentionally dropped (training-mode BN cancels them).
    """
    w1, _b1, g1, be1, w2, _b2, g2, be2 = params
    C = w1.shape[0]

    # band[w_in, w_out, dx] = 1 iff w_in == w_out + dx - 1  (static constant)
    band = np.zeros((W, W, 3), np.float32)
    for wo in range(W):
        for dx in range(3):
            wi = wo + dx - 1
            if 0 <= wi < W:
                band[wi, wo, dx] = 1.0
    band = jnp.asarray(band)

    def banded(w_oihw):
        b = jnp.einsum('abk,oidk->daibo', band, w_oihw.astype(jnp.float32))
        return b.reshape(3, W * C, W * C)

    def tiled_row(v):
        return jnp.tile(v.reshape(1, C).astype(jnp.float32), (1, W))

    chan_match = jnp.asarray(np.tile(np.eye(C, dtype=np.float32), (W, W)))

    return (banded(w1), tiled_row(g1), tiled_row(be1),
            banded(w2), tiled_row(g2), tiled_row(be2), chan_match)


def resblock_forward_nhwc(x2d, prepped, *, N, H, W, C):
    """Hot-path entry point: x2d is (N*H, W*C) f32 (flattened NHWC layout)."""
    vmem = pl.BlockSpec(memory_space=pltpu.MemorySpace.VMEM)
    kernel = functools.partial(_resblock_kernel, N=N, H=H, W=W)
    # TODO(synk): when scaling beyond toy shapes, add a grid over N (or N*H
    # row-tiles with a 1-row halo) with dimension_semantics=("parallel",...)
    # and two-phase BN statistics so both v7x TensorCores are used, and set
    # pltpu.CompilerParams(vmem_limit_bytes=...) for the 64 MiB v7x VMEM.
    return pl.pallas_call(
        kernel,
        out_shape=jax.ShapeDtypeStruct((N * H, W * C), jnp.float32),
        in_specs=[vmem] * 8,
        out_specs=vmem,
        scratch_shapes=[pltpu.VMEM((N * (H + 2), W * C), jnp.float32)],
    )(x2d, *prepped)


@jax.jit
def resblock_forward(x_nchw, params):
    """PyTorch-layout convenience wrapper: (N, C, H, W) in / out.

    In a real network keep activations in the lane-dense (N*H, W*C) layout
    across layers and call prepare_resblock_params once, so the boundary
    transposes and weight re-pack stay out of the per-call path.
    """
    N, C, H, W = x_nchw.shape
    prepped = prepare_resblock_params(params, W=W)
    x2d = jnp.transpose(x_nchw.astype(jnp.float32),
                        (0, 2, 3, 1)).reshape(N * H, W * C)
    out2d = resblock_forward_nhwc(x2d, prepped, N=N, H=H, W=W, C=C)
    return jnp.transpose(out2d.reshape(N, H, W, C), (0, 3, 1, 2))


def _reference(x, params):
    """Pure-JAX reference of the PyTorch forward (NCHW), biases included."""
    w1, b1, g1, be1, w2, b2, g2, be2 = params

    def conv(y, w, b):
        z = jax.lax.conv_general_dilated(
            y, w, window_strides=(1, 1), padding="SAME",
            dimension_numbers=("NCHW", "OIHW", "NCHW"))
        return z + b[None, :, None, None]

    def bn(y, g, be):
        mean = jnp.mean(y, axis=(0, 2, 3), keepdims=True)
        var = jnp.mean((y - mean) ** 2, axis=(0, 2, 3), keepdims=True)
        return ((y - mean) / jnp.sqrt(var + EPS)) * g[None, :, None, None] \
            + be[None, :, None, None]

    h = jax.nn.relu(bn(conv(x, w1, b1), g1, be1))
    h = bn(conv(h, w2, b2), g2, be2) + x
    return jax.nn.relu(h)


if __name__ == "__main__":
    # Small shapes consistent with the module: num_hidden=32, batch=2, 8x8 maps.
    N, C, H, W = 2, 32, 8, 8

    key = jax.random.PRNGKey(0)
    keys = jax.random.split(key, 9)
    x = jax.random.normal(keys[0], (N, C, H, W), jnp.float32)

    # Deterministic synthetic parameters (shapes from ResBlock.__init__).
    w1 = 0.1 * jax.random.normal(keys[1], (C, C, 3, 3), jnp.float32)   # conv1.weight (OIHW)
    b1 = 0.1 * jax.random.normal(keys[2], (C,), jnp.float32)           # conv1.bias
    g1 = 1.0 + 0.1 * jax.random.normal(keys[3], (C,), jnp.float32)     # bn1.weight
    be1 = 0.1 * jax.random.normal(keys[4], (C,), jnp.float32)          # bn1.bias
    w2 = 0.1 * jax.random.normal(keys[5], (C, C, 3, 3), jnp.float32)   # conv2.weight (OIHW)
    b2 = 0.1 * jax.random.normal(keys[6], (C,), jnp.float32)           # conv2.bias
    g2 = 1.0 + 0.1 * jax.random.normal(keys[7], (C,), jnp.float32)     # bn2.weight
    be2 = 0.1 * jax.random.normal(keys[8], (C,), jnp.float32)          # bn2.bias
    params = (w1, b1, g1, be1, w2, b2, g2, be2)

    out = jax.block_until_ready(resblock_forward(x, params))
    ref = jax.block_until_ready(_reference(x, params))

    assert out.shape == (N, C, H, W)
    err = jnp.max(jnp.abs(out - ref))
    assert jnp.allclose(out, ref, atol=1e-4, rtol=1e-4), f"max abs err = {err}"

    print("KERNEL_OK")
</pallas_src>

<mosaic_0001>
module attributes {stable_mosaic.version = 11 : i64} {
  func.func @_resblock_kernel(%arg0: memref<16x256xf32, #tpu.memory_space<vmem>>, %arg1: memref<3x256x256xf32, #tpu.memory_space<vmem>>, %arg2: memref<1x256xf32, #tpu.memory_space<vmem>>, %arg3: memref<1x256xf32, #tpu.memory_space<vmem>>, %arg4: memref<3x256x256xf32, #tpu.memory_space<vmem>>, %arg5: memref<1x256xf32, #tpu.memory_space<vmem>>, %arg6: memref<1x256xf32, #tpu.memory_space<vmem>>, %arg7: memref<256x256xf32, #tpu.memory_space<vmem>>, %arg8: memref<16x256xf32, #tpu.memory_space<vmem>>, %arg9: memref<20x256xf32, #tpu.memory_space<vmem>>) attributes {dimension_semantics = [], scalar_prefetch = 0 : i64, scratch_operands = 1 : i64, tpu.core_type = #tpu.core_type<tc>} {
    %c0 = arith.constant 0 : index
    %c0_0 = arith.constant 0 : index
    %0 = vector.load %arg0[%c0, %c0_0] : memref<16x256xf32, #tpu.memory_space<vmem>>, vector<16x256xf32>
    %c0_1 = arith.constant 0 : index
    %c0_2 = arith.constant 0 : index
    %1 = vector.load %arg7[%c0_1, %c0_2] : memref<256x256xf32, #tpu.memory_space<vmem>>, vector<256x256xf32>
    %cst = arith.constant 1.000000e+00 : f32
    %2 = vector.broadcast %cst : f32 to vector<1x16xf32>
    %cst_3 = arith.constant 0.000000e+00 : f32
    %3 = vector.broadcast %cst_3 : f32 to vector<20x256xf32>
    %c0_4 = arith.constant 0 : index
    %c0_5 = arith.constant 0 : index
    %4 = vector.load %arg9[%c0_4, %c0_5] : memref<20x256xf32, #tpu.memory_space<vmem>>, vector<20x256xf32>
    tpu.vector_store %arg9[%c0_4, %c0_5], %3 {strides = array<i32>} : memref<20x256xf32, #tpu.memory_space<vmem>>, vector<20x256xf32>,
    %5 = vector.extract_strided_slice %0 {offsets = [0, 0], sizes = [8, 256], strides = [1, 1]} : vector<16x256xf32> to vector<8x256xf32>
    %c1 = arith.constant 1 : index
    %c0_6 = arith.constant 0 : index
    %6 = vector.load %arg9[%c1, %c0_6] : memref<20x256xf32, #tpu.memory_space<vmem>>, vector<8x256xf32>
    tpu.vector_store %arg9[%c1, %c0_6], %5 {strides = array<i32>} : memref<20x256xf32, #tpu.memory_space<vmem>>, vector<8x256xf32>,
    %7 = vector.extract_strided_slice %0 {offsets = [8, 0], sizes = [8, 256], strides = [1, 1]} : vector<16x256xf32> to vector<8x256xf32>
    %c11 = arith.constant 11 : index
    %c0_7 = arith.constant 0 : index
    %8 = vector.load %arg9[%c11, %c0_7] : memref<20x256xf32, #tpu.memory_space<vmem>>, vector<8x256xf32>
    tpu.vector_store %arg9[%c11, %c0_7], %7 {strides = array<i32>} : memref<20x256xf32, #tpu.memory_space<vmem>>, vector<8x256xf32>,
    %cst_8 = arith.constant 0.000000e+00 : f32
    %9 = vector.broadcast %cst_8 : f32 to vector<16x256xf32>
    %c0_9 = arith.constant 0 : index
    %c0_10 = arith.constant 0 : index
    %10 = vector.load %arg9[%c0_9, %c0_10] : memref<20x256xf32, #tpu.memory_space<vmem>>, vector<8x256xf32>
    %c10 = arith.constant 10 : index
    %c0_11 = arith.constant 0 : index
    %11 = vector.load %arg9[%c10, %c0_11] : memref<20x256xf32, #tpu.memory_space<vmem>>, vector<8x256xf32>
    %12 = tpu.concatenate %10, %11 in 0 : vector<8x256xf32>, vector<8x256xf32> -> vector<16x256xf32>
    %c0_12 = arith.constant 0 : index
    %c0_13 = arith.constant 0 : index
    %c0_14 = arith.constant 0 : index
    %13 = vector.load %arg1[%c0_12, %c0_13, %c0_14] : memref<3x256x256xf32, #tpu.memory_space<vmem>>, vector<1x256x256xf32>
    %14 = vector.shape_cast %13 : vector<1x256x256xf32> to vector<256x256xf32>
    %cst_15 = arith.constant dense<0.000000e+00> : vector<16x256xf32>
    %15 = tpu.matmul %12, %14, %cst_15 {dimension_numbers = #tpu.dot_dimension_numbers<[1], [0], [0], [1], [0, 0, 1, 1], [], []>} : vector<16x256xf32>, vector<256x256xf32>, vector<16x256xf32> -> vector<16x256xf32>
    %16 = arith.addf %9, %15 : vector<16x256xf32>
    %c1_16 = arith.constant 1 : index
    %c0_17 = arith.constant 0 : index
    %17 = vector.load %arg9[%c1_16, %c0_17] : memref<20x256xf32, #tpu.memory_space<vmem>>, vector<8x256xf32>
    %c11_18 = arith.constant 11 : index
    %c0_19 = arith.constant 0 : index
    %18 = vector.load %arg9[%c11_18, %c0_19] : memref<20x256xf32, #tpu.memory_space<vmem>>, vector<8x256xf32>
    %19 = tpu.concatenate %17, %18 in 0 : vector<8x256xf32>, vector<8x256xf32> -> vector<16x256xf32>
    %c1_20 = arith.constant 1 : index
    %c0_21 = arith.constant 0 : index
    %c0_22 = arith.constant 0 : index
    %20 = vector.load %arg1[%c1_20, %c0_21, %c0_22] : memref<3x256x256xf32, #tpu.memory_space<vmem>>, vector<1x256x256xf32>
    %21 = vector.shape_cast %20 : vector<1x256x256xf32> to vector<256x256xf32>
    %cst_23 = arith.constant dense<0.000000e+00> : vector<16x256xf32>
    %22 = tpu.matmul %19, %21, %cst_23 {dimension_numbers = #tpu.dot_dimension_numbers<[1], [0], [0], [1], [0, 0, 1, 1], [], []>} : vector<16x256xf32>, vector<256x256xf32>, vector<16x256xf32> -> vector<16x256xf32>
    %23 = arith.addf %16, %22 : vector<16x256xf32>
    %c2 = arith.constant 2 : index
    %c0_24 = arith.constant 0 : index
    %24 = vector.load %arg9[%c2, %c0_24] : memref<20x256xf32, #tpu.memory_space<vmem>>, vector<8x256xf32>
    %c12 = arith.constant 12 : index
    %c0_25 = arith.constant 0 : index
    %25 = vector.load %arg9[%c12, %c0_25] : memref<20x256xf32, #tpu.memory_space<vmem>>, vector<8x256xf32>
    %26 = tpu.concatenate %24, %25 in 0 : vector<8x256xf32>, vector<8x256xf32> -> vector<16x256xf32>
    %c2_26 = arith.constant 2 : index
    %c0_27 = arith.constant 0 : index
    %c0_28 = arith.constant 0 : index
    %27 = vector.load %arg1[%c2_26, %c0_27, %c0_28] : memref<3x256x256xf32, #tpu.memory_space<vmem>>, vector<1x256x256xf32>
    %28 = vector.shape_cast %27 : vector<1x256x256xf32> to vector<256x256xf32>
    %cst_29 = arith.constant dense<0.000000e+00> : vector<16x256xf32>
    %29 = tpu.matmul %26, %28, %cst_29 {dimension_numbers = #tpu.dot_dimension_numbers<[1], [0], [0], [1], [0, 0, 1, 1], [], []>} : vector<16x256xf32>, vector<256x256xf32>, vector<16x256xf32> -> vector<16x256xf32>
    %30 = arith.addf %23, %29 : vector<16x256xf32>
    %c0_30 = arith.constant 0 : index
    %c0_31 = arith.constant 0 : index
    %31 = vector.load %arg2[%c0_30, %c0_31] : memref<1x256xf32, #tpu.memory_space<vmem>>, vector<1x256xf32>
    %c0_32 = arith.constant 0 : index
    %c0_33 = arith.constant 0 : index
    %32 = vector.load %arg3[%c0_32, %c0_33] : memref<1x256xf32, #tpu.memory_space<vmem>>, vector<1x256xf32>
    %cst_34 = arith.constant dense<0.000000e+00> : vector<1x256xf32>
    %33 = tpu.matmul %2, %30, %cst_34 {dimension_numbers = #tpu.dot_dimension_numbers<[1], [0], [0], [1], [0, 0, 1, 1], [], []>} : vector<1x16xf32>, vector<16x256xf32>, vector<1x256xf32> -> vector<1x256xf32>
    %cst_35 = arith.constant dense<0.000000e+00> : vector<1x256xf32>
    %34 = tpu.matmul %33, %1, %cst_35 {dimension_numbers = #tpu.dot_dimension_numbers<[1], [0], [0], [1], [0, 0, 1, 1], [], []>} : vector<1x256xf32>, vector<256x256xf32>, vector<1x256xf32> -> vector<1x256xf32>
    %cst_36 = arith.constant 7.812500e-03 : f32
    %35 = vector.broadcast %cst_36 : f32 to vector<1x256xf32>
    %36 = arith.mulf %34, %35 : vector<1x256xf32>
    %37 = vector.broadcast %36 : vector<1x256xf32> to vector<16x256xf32>
    %38 = arith.subf %30, %37 : vector<16x256xf32>
    %39 = arith.mulf %38, %38 : vector<16x256xf32>
    %cst_37 = arith.constant dense<0.000000e+00> : vector<1x256xf32>
    %40 = tpu.matmul %2, %39, %cst_37 {dimension_numbers = #tpu.dot_dimension_numbers<[1], [0], [0], [1], [0, 0, 1, 1], [], []>} : vector<1x16xf32>, vector<16x256xf32>, vector<1x256xf32> -> vector<1x256xf32>
    %cst_38 = arith.constant dense<0.000000e+00> : vector<1x256xf32>
    %41 = tpu.matmul %40, %1, %cst_38 {dimension_numbers = #tpu.dot_dimension_numbers<[1], [0], [0], [1], [0, 0, 1, 1], [], []>} : vector<1x256xf32>, vector<256x256xf32>, vector<1x256xf32> -> vector<1x256xf32>
    %cst_39 = arith.constant 7.812500e-03 : f32
    %42 = vector.broadcast %cst_39 : f32 to vector<1x256xf32>
    %43 = arith.mulf %41, %42 : vector<1x256xf32>
    %cst_40 = arith.constant 9.99999974E-6 : f32
    %44 = vector.broadcast %cst_40 : f32 to vector<1x256xf32>
    %45 = arith.addf %43, %44 : vector<1x256xf32>
    %46 = math.rsqrt %45 : vector<1x256xf32>
    %47 = arith.mulf %31, %46 : vector<1x256xf32>
    %48 = vector.broadcast %47 : vector<1x256xf32> to vector<16x256xf32>
    %49 = arith.mulf %38, %48 : vector<16x256xf32>
    %50 = vector.broadcast %32 : vector<1x256xf32> to vector<16x256xf32>
    %51 = arith.addf %49, %50 : vector<16x256xf32>
    %cst_41 = arith.constant 0.000000e+00 : f32
    %52 = vector.broadcast %cst_41 : f32 to vector<16x256xf32>
    %53 = arith.maximumf %51, %52 : vector<16x256xf32>
    %54 = vector.extract_strided_slice %53 {offsets = [0, 0], sizes = [8, 256], strides = [1, 1]} : vector<16x256xf32> to vector<8x256xf32>
    %c1_42 = arith.constant 1 : index
    %c0_43 = arith.constant 0 : index
    %55 = vector.load %arg9[%c1_42, %c0_43] : memref<20x256xf32, #tpu.memory_space<vmem>>, vector<8x256xf32>
    tpu.vector_store %arg9[%c1_42, %c0_43], %54 {strides = array<i32>} : memref<20x256xf32, #tpu.memory_space<vmem>>, vector<8x256xf32>,
    %56 = vector.extract_strided_slice %53 {offsets = [8, 0], sizes = [8, 256], strides = [1, 1]} : vector<16x256xf32> to vector<8x256xf32>
    %c11_44 = arith.constant 11 : index
    %c0_45 = arith.constant 0 : index
    %57 = vector.load %arg9[%c11_44, %c0_45] : memref<20x256xf32, #tpu.memory_space<vmem>>, vector<8x256xf32>
    tpu.vector_store %arg9[%c11_44, %c0_45], %56 {strides = array<i32>} : memref<20x256xf32, #tpu.memory_space<vmem>>, vector<8x256xf32>,
    %cst_46 = arith.constant 0.000000e+00 : f32
    %58 = vector.broadcast %cst_46 : f32 to vector<16x256xf32>
    %c0_47 = arith.constant 0 : index
    %c0_48 = arith.constant 0 : index
    %59 = vector.load %arg9[%c0_47, %c0_48] : memref<20x256xf32, #tpu.memory_space<vmem>>, vector<8x256xf32>
    %c10_49 = arith.constant 10 : index
    %c0_50 = arith.constant 0 : index
    %60 = vector.load %arg9[%c10_49, %c0_50] : memref<20x256xf32, #tpu.memory_space<vmem>>, vector<8x256xf32>
    %61 = tpu.concatenate %59, %60 in 0 : vector<8x256xf32>, vector<8x256xf32> -> vector<16x256xf32>
    %c0_51 = arith.constant 0 : index
    %c0_52 = arith.constant 0 : index
    %c0_53 = arith.constant 0 : index
    %62 = vector.load %arg4[%c0_51, %c0_52, %c0_53] : memref<3x256x256xf32, #tpu.memory_space<vmem>>, vector<1x256x256xf32>
    %63 = vector.shape_cast %62 : vector<1x256x256xf32> to vector<256x256xf32>
    %cst_54 = arith.constant dense<0.000000e+00> : vector<16x256xf32>
    %64 = tpu.matmul %61, %63, %cst_54 {dimension_numbers = #tpu.dot_dimension_numbers<[1], [0], [0], [1], [0, 0, 1, 1], [], []>} : vector<16x256xf32>, vector<256x256xf32>, vector<16x256xf32> -> vector<16x256xf32>
    %65 = arith.addf %58, %64 : vector<16x256xf32>
    %c1_55 = arith.constant 1 : index
    %c0_56 = arith.constant 0 : index
    %66 = vector.load %arg9[%c1_55, %c0_56] : memref<20x256xf32, #tpu.memory_space<vmem>>, vector<8x256xf32>
    %c11_57 = arith.constant 11 : index
    %c0_58 = arith.constant 0 : index
    %67 = vector.load %arg9[%c11_57, %c0_58] : memref<20x256xf32, #tpu.memory_space<vmem>>, vector<8x256xf32>
    %68 = tpu.concatenate %66, %67 in 0 : vector<8x256xf32>, vector<8x256xf32> -> vector<16x256xf32>
    %c1_59 = arith.constant 1 : index
    %c0_60 = arith.constant 0 : index
    %c0_61 = arith.constant 0 : index
    %69 = vector.load %arg4[%c1_59, %c0_60, %c0_61] : memref<3x256x256xf32, #tpu.memory_space<vmem>>, vector<1x256x256xf32>
    %70 = vector.shape_cast %69 : vector<1x256x256xf32> to vector<256x256xf32>
    %cst_62 = arith.constant dense<0.000000e+00> : vector<16x256xf32>
    %71 = tpu.matmul %68, %70, %cst_62 {dimension_numbers = #tpu.dot_dimension_numbers<[1], [0], [0], [1], [0, 0, 1, 1], [], []>} : vector<16x256xf32>, vector<256x256xf32>, vector<16x256xf32> -> vector<16x256xf32>
    %72 = arith.addf %65, %71 : vector<16x256xf32>
    %c2_63 = arith.constant 2 : index
    %c0_64 = arith.constant 0 : index
    %73 = vector.load %arg9[%c2_63, %c0_64] : memref<20x256xf32, #tpu.memory_space<vmem>>, vector<8x256xf32>
    %c12_65 = arith.constant 12 : index
    %c0_66 = arith.constant 0 : index
    %74 = vector.load %arg9[%c12_65, %c0_66] : memref<20x256xf32, #tpu.memory_space<vmem>>, vector<8x256xf32>
    %75 = tpu.concatenate %73, %74 in 0 : vector<8x256xf32>, vector<8x256xf32> -> vector<16x256xf32>
    %c2_67 = arith.constant 2 : index
    %c0_68 = arith.constant 0 : index
    %c0_69 = arith.constant 0 : index
    %76 = vector.load %arg4[%c2_67, %c0_68, %c0_69] : memref<3x256x256xf32, #tpu.memory_space<vmem>>, vector<1x256x256xf32>
    %77 = vector.shape_cast %76 : vector<1x256x256xf32> to vector<256x256xf32>
    %cst_70 = arith.constant dense<0.000000e+00> : vector<16x256xf32>
    %78 = tpu.matmul %75, %77, %cst_70 {dimension_numbers = #tpu.dot_dimension_numbers<[1], [0], [0], [1], [0, 0, 1, 1], [], []>} : vector<16x256xf32>, vector<256x256xf32>, vector<16x256xf32> -> vector<16x256xf32>
    %79 = arith.addf %72, %78 : vector<16x256xf32>
    %c0_71 = arith.constant 0 : index
    %c0_72 = arith.constant 0 : index
    %80 = vector.load %arg5[%c0_71, %c0_72] : memref<1x256xf32, #tpu.memory_space<vmem>>, vector<1x256xf32>
    %c0_73 = arith.constant 0 : index
    %c0_74 = arith.constant 0 : index
    %81 = vector.load %arg6[%c0_73, %c0_74] : memref<1x256xf32, #tpu.memory_space<vmem>>, vector<1x256xf32>
    %cst_75 = arith.constant dense<0.000000e+00> : vector<1x256xf32>
    %82 = tpu.matmul %2, %79, %cst_75 {dimension_numbers = #tpu.dot_dimension_numbers<[1], [0], [0], [1], [0, 0, 1, 1], [], []>} : vector<1x16xf32>, vector<16x256xf32>, vector<1x256xf32> -> vector<1x256xf32>
    %cst_76 = arith.constant dense<0.000000e+00> : vector<1x256xf32>
    %83 = tpu.matmul %82, %1, %cst_76 {dimension_numbers = #tpu.dot_dimension_numbers<[1], [0], [0], [1], [0, 0, 1, 1], [], []>} : vector<1x256xf32>, vector<256x256xf32>, vector<1x256xf32> -> vector<1x256xf32>
    %cst_77 = arith.constant 7.812500e-03 : f32
    %84 = vector.broadcast %cst_77 : f32 to vector<1x256xf32>
    %85 = arith.mulf %83, %84 : vector<1x256xf32>
    %86 = vector.broadcast %85 : vector<1x256xf32> to vector<16x256xf32>
    %87 = arith.subf %79, %86 : vector<16x256xf32>
    %88 = arith.mulf %87, %87 : vector<16x256xf32>
    %cst_78 = arith.constant dense<0.000000e+00> : vector<1x256xf32>
    %89 = tpu.matmul %2, %88, %cst_78 {dimension_numbers = #tpu.dot_dimension_numbers<[1], [0], [0], [1], [0, 0, 1, 1], [], []>} : vector<1x16xf32>, vector<16x256xf32>, vector<1x256xf32> -> vector<1x256xf32>
    %cst_79 = arith.constant dense<0.000000e+00> : vector<1x256xf32>
    %90 = tpu.matmul %89, %1, %cst_79 {dimension_numbers = #tpu.dot_dimension_numbers<[1], [0], [0], [1], [0, 0, 1, 1], [], []>} : vector<1x256xf32>, vector<256x256xf32>, vector<1x256xf32> -> vector<1x256xf32>
    %cst_80 = arith.constant 7.812500e-03 : f32
    %91 = vector.broadcast %cst_80 : f32 to vector<1x256xf32>
    %92 = arith.mulf %90, %91 : vector<1x256xf32>
    %cst_81 = arith.constant 9.99999974E-6 : f32
    %93 = vector.broadcast %cst_81 : f32 to vector<1x256xf32>
    %94 = arith.addf %92, %93 : vector<1x256xf32>
    %95 = math.rsqrt %94 : vector<1x256xf32>
    %96 = arith.mulf %80, %95 : vector<1x256xf32>
    %97 = vector.broadcast %96 : vector<1x256xf32> to vector<16x256xf32>
    %98 = arith.mulf %87, %97 : vector<16x256xf32>
    %99 = vector.broadcast %81 : vector<1x256xf32> to vector<16x256xf32>
    %100 = arith.addf %98, %99 : vector<16x256xf32>
    %101 = arith.addf %100, %0 : vector<16x256xf32>
    %cst_82 = arith.constant 0.000000e+00 : f32
    %102 = vector.broadcast %cst_82 : f32 to vector<16x256xf32>
    %103 = arith.maximumf %101, %102 : vector<16x256xf32>
    %c0_83 = arith.constant 0 : index
    %c0_84 = arith.constant 0 : index
    %104 = vector.load %arg8[%c0_83, %c0_84] : memref<16x256xf32, #tpu.memory_space<vmem>>, vector<16x256xf32>
    tpu.vector_store %arg8[%c0_83, %c0_84], %103 {strides = array<i32>} : memref<16x256xf32, #tpu.memory_space<vmem>>, vector<16x256xf32>,
    return
  }
}

</mosaic_0001>

<llo_original>
// kernel: resblock_forward.1
$region0: #{resblock_forward.1}
  #allocation0 [shape = 'u32[]', space=smem, size = 0x4, offset = 0x4, fixed_abs, tag = 'smem constant byte address 0x4 - core index']
  #allocation1 [shape = 'u32[144,128]{1,0:T(1,128)}', space=vmem, size = 0x12000, scoped, tag = 'internal scratch']
  #allocation2 [shape = 'f32[20,256]{1,0:T(8,128)}', space=vmem, size = 0x6000, scoped, tag = 'scratch operand']
  %s0 = inlined_call_operand.vmem [shape: f32[16,256], index: 0, kind: input, shape index: {}]
  %s1 = inlined_call_operand.vmem [shape: f32[3,256,256], index: 1, kind: input, shape index: {}]
  %s2 = inlined_call_operand.vmem [shape: f32[1,256], index: 2, kind: input, shape index: {}]
  %s3 = inlined_call_operand.vmem [shape: f32[1,256], index: 3, kind: input, shape index: {}]
  %s4 = inlined_call_operand.vmem [shape: f32[3,256,256], index: 4, kind: input, shape index: {}]
  %s5 = inlined_call_operand.vmem [shape: f32[1,256], index: 5, kind: input, shape index: {}]
  %s6 = inlined_call_operand.vmem [shape: f32[1,256], index: 6, kind: input, shape index: {}]
  %s7 = inlined_call_operand.vmem [shape: f32[256,256], index: 7, kind: input, shape index: {}]
  %s8 = inlined_call_operand.vmem [shape: f32[16,256], index: 8, kind: output, shape index: {}]
  %s9 = sld [smem:[#allocation0]]
  $region42: #{resblock_forward.1} parent=0
    _
  %s11 = ssub.s32 1, %s9
  %s12 = scalar_select 0, %s11, %s9
  // Predicated region
  $region2: #{resblock_forward.1} parent=0 // pred_check
    _
  $region3: #{resblock_forward.1} parent=0 // pred_check_branch
    %14 = sbr.rel (0) target = $region5
  $region4: #{resblock_forward.1} parent=0 // pred_region
    _
  $region5: #{resblock_forward.1} parent=0 // pred_fallthru
    _
  // Predicated region
  $region6: #{resblock_forward.1} parent=0 // pred_check
    _
  $region7: #{resblock_forward.1} parent=0 // pred_check_branch
    %16 = sbr.rel (0) target = $region9
  $region8: #{resblock_forward.1} parent=0 // pred_region
    _
  $region9: #{resblock_forward.1} parent=0 // pred_fallthru
    _
  // Predicated region
  $region10: #{resblock_forward.1} parent=0 // pred_check
    _
  $region11: #{resblock_forward.1} parent=0 // pred_check_branch
    %18 = sbr.rel (0) target = $region13
  $region12: #{resblock_forward.1} parent=0 // pred_region
    _
  $region13: #{resblock_forward.1} parent=0 // pred_fallthru
    _
  // Predicated region
  $region14: #{resblock_forward.1} parent=0 // pred_check
    _
  $region15: #{resblock_forward.1} parent=0 // pred_check_branch
    %20 = sbr.rel (0) target = $region17
  $region16: #{resblock_forward.1} parent=0 // pred_region
    _
  $region17: #{resblock_forward.1} parent=0 // pred_fallthru
    _
  // Predicated region
  $region18: #{resblock_forward.1} parent=0 // pred_check
    _
  $region19: #{resblock_forward.1} parent=0 // pred_check_branch
    %22 = sbr.rel (0) target = $region21
  $region20: #{resblock_forward.1} parent=0 // pred_region
    _
  $region21: #{resblock_forward.1} parent=0 // pred_fallthru
    _
  // Predicated region
  $region22: #{resblock_forward.1} parent=0 // pred_check
    _
  $region23: #{resblock_forward.1} parent=0 // pred_check_branch
    %24 = sbr.rel (0) target = $region25
  $region24: #{resblock_forward.1} parent=0 // pred_region
    _
  $region25: #{resblock_forward.1} parent=0 // pred_fallthru
    _
  // Predicated region
  $region26: #{resblock_forward.1} parent=0 // pred_check
    _
  $region27: #{resblock_forward.1} parent=0 // pred_check_branch
    %26 = sbr.rel (0) target = $region29
  $region28: #{resblock_forward.1} parent=0 // pred_region
    _
  $region29: #{resblock_forward.1} parent=0 // pred_fallthru
    _
  // Predicated region
  $region30: #{resblock_forward.1} parent=0 // pred_check
    _
  $region31: #{resblock_forward.1} parent=0 // pred_check_branch
    %28 = sbr.rel (0) target = $region33
  $region32: #{resblock_forward.1} parent=0 // pred_region
    _
  $region33: #{resblock_forward.1} parent=0 // pred_fallthru
    _
  %v29 = vld [vmem:[%s0] sm:$0xff]
  %v30 = vld [vmem:[%s0 + $0x8] sm:$0xff]
  %v31 = vld [vmem:[%s0 + $0x10] sm:$0xff]
  %v32 = vld [vmem:[%s0 + $0x18] sm:$0xff]
  %v33 = vld [vmem:[%s7] sm:$0xff]
  %v34 = vld [vmem:[%s7 + $0x8] sm:$0xff]
  %v35 = vld [vmem:[%s7 + $0x10] sm:$0xff]
  %v36 = vld [vmem:[%s7 + $0x18] sm:$0xff]
  %v37 = vld [vmem:[%s7 + $0x20] sm:$0xff]
  %v38 = vld [vmem:[%s7 + $0x28] sm:$0xff]
  %v39 = vld [vmem:[%s7 + $0x30] sm:$0xff]
  %v40 = vld [vmem:[%s7 + $0x38] sm:$0xff]
  %v41 = vld [vmem:[%s7 + $0x40] sm:$0xff]
  %v42 = vld [vmem:[%s7 + $0x48] sm:$0xff]
  %v43 = vld [vmem:[%s7 + $0x50] sm:$0xff]
  %v44 = vld [vmem:[%s7 + $0x58] sm:$0xff]
  %v45 = vld [vmem:[%s7 + $0x60] sm:$0xff]
  %v46 = vld [vmem:[%s7 + $0x68] sm:$0xff]
  %v47 = vld [vmem:[%s7 + $0x70] sm:$0xff]
  %v48 = vld [vmem:[%s7 + $0x78] sm:$0xff]
  %v49 = vld [vmem:[%s7 + $0x80] sm:$0xff]
  %v50 = vld [vmem:[%s7 + $0x88] sm:$0xff]
  %v51 = vld [vmem:[%s7 + $0x90] sm:$0xff]
  %v52 = vld [vmem:[%s7 + $0x98] sm:$0xff]
  %v53 = vld [vmem:[%s7 + $0xa0] sm:$0xff]
  %v54 = vld [vmem:[%s7 + $0xa8] sm:$0xff]
  %v55 = vld [vmem:[%s7 + $0xb0] sm:$0xff]
  %v56 = vld [vmem:[%s7 + $0xb8] sm:$0xff]
  %v57 = vld [vmem:[%s7 + $0xc0] sm:$0xff]
  %v58 = vld [vmem:[%s7 + $0xc8] sm:$0xff]
  %v59 = vld [vmem:[%s7 + $0xd0] sm:$0xff]
  %v60 = vld [vmem:[%s7 + $0xd8] sm:$0xff]
  %v61 = vld [vmem:[%s7 + $0xe0] sm:$0xff]
  %v62 = vld [vmem:[%s7 + $0xe8] sm:$0xff]
  %v63 = vld [vmem:[%s7 + $0xf0] sm:$0xff]
  %v64 = vld [vmem:[%s7 + $0xf8] sm:$0xff]
  %v65 = vld [vmem:[%s7 + $0x100] sm:$0xff]
  %v66 = vld [vmem:[%s7 + $0x108] sm:$0xff]
  %v67 = vld [vmem:[%s7 + $0x110] sm:$0xff]
  %v68 = vld [vmem:[%s7 + $0x118] sm:$0xff]
  %v69 = vld [vmem:[%s7 + $0x120] sm:$0xff]
  %v70 = vld [vmem:[%s7 + $0x128] sm:$0xff]
  %v71 = vld [vmem:[%s7 + $0x130] sm:$0xff]
  %v72 = vld [vmem:[%s7 + $0x138] sm:$0xff]
  %v73 = vld [vmem:[%s7 + $0x140] sm:$0xff]
  %v74 = vld [vmem:[%s7 + $0x148] sm:$0xff]
  %v75 = vld [vmem:[%s7 + $0x150] sm:$0xff]
  %v76 = vld [vmem:[%s7 + $0x158] sm:$0xff]
  %v77 = vld [vmem:[%s7 + $0x160] sm:$0xff]
  %v78 = vld [vmem:[%s7 + $0x168] sm:$0xff]
  %v79 = vld [vmem:[%s7 + $0x170] sm:$0xff]
  %v80 = vld [vmem:[%s7 + $0x178] sm:$0xff]
  %v81 = vld [vmem:[%s7 + $0x180] sm:$0xff]
  %v82 = vld [vmem:[%s7 + $0x188] sm:$0xff]
  %v83 = vld [vmem:[%s7 + $0x190] sm:$0xff]
  %v84 = vld [vmem:[%s7 + $0x198] sm:$0xff]
  %v85 = vld [vmem:[%s7 + $0x1a0] sm:$0xff]
  %v86 = vld [vmem:[%s7 + $0x1a8] sm:$0xff]
  %v87 = vld [vmem:[%s7 + $0x1b0] sm:$0xff]
  %v88 = vld [vmem:[%s7 + $0x1b8] sm:$0xff]
  %v89 = vld [vmem:[%s7 + $0x1c0] sm:$0xff]
  %v90 = vld [vmem:[%s7 + $0x1c8] sm:$0xff]
  %v91 = vld [vmem:[%s7 + $0x1d0] sm:$0xff]
  %v92 = vld [vmem:[%s7 + $0x1d8] sm:$0xff]
  %v93 = vld [vmem:[%s7 + $0x1e0] sm:$0xff]
  %v94 = vld [vmem:[%s7 + $0x1e8] sm:$0xff]
  %v95 = vld [vmem:[%s7 + $0x1f0] sm:$0xff]
  %v96 = vld [vmem:[%s7 + $0x1f8] sm:$0xff]
  %97 = vst [vmem:[#allocation2] sm:$0xff] 0.0
  %98 = vst [vmem:[#allocation2 + $0x8] sm:$0xff] 0.0
  %99 = vst [vmem:[#allocation2 + $0x10] sm:$0xff] 0.0
  %100 = vst [vmem:[#allocation2 + $0x18] sm:$0xff] 0.0
  %101 = vst [vmem:[#allocation2 + $0x20] sm:$0xf] 0.0
  %102 = vst [vmem:[#allocation2 + $0x28] sm:$0xf] 0.0
  %v105 = vrot.slane %v29, 7
  %v106 = vrot.slane %v30, 7
  %109 = vst [vmem:[#allocation2] sm:$0xfe] %v105
  %110 = vst [vmem:[#allocation2 + $0x8] sm:$0xfe] %v106
  %111 = vst [vmem:[#allocation2 + $0x10] sm:$0x1] %v105
  %112 = vst [vmem:[#allocation2 + $0x18] sm:$0x1] %v106
  %v115 = vrot.slane %v31, 5
  %v116 = vrot.slane %v32, 5
  %119 = vst [vmem:[#allocation2 + $0x10] sm:$0xf8] %v115
  %120 = vst [vmem:[#allocation2 + $0x18] sm:$0xf8] %v116
  %121 = vst [vmem:[#allocation2 + $0x20] sm:$0x7] %v115
  %122 = vst [vmem:[#allocation2 + $0x28] sm:$0x7] %v116
  %v123 = vld [vmem:[#allocation2] sm:$0xff]
  %v124 = vld [vmem:[#allocation2 + $0x8] sm:$0xff]
  %v125 = vld [vmem:[#allocation2 + $0x10] sm:$0xfc]
  %v126 = vld [vmem:[#allocation2 + $0x18] sm:$0xfc]
  %v127 = vld [vmem:[#allocation2 + $0x20] sm:$0x3]
  %v128 = vld [vmem:[#allocation2 + $0x28] sm:$0x3]
  %vm133 = vcmask 1045504
  %v134 = vrot.slane %v125, 2
  %v135 = vrot.slane %v127, 2
  %v136 = vsel %vm133, %v134, %v135
  %v137 = vrot.slane %v126, 2
  %v138 = vrot.slane %v128, 2
  %v139 = vsel %vm133, %v137, %v138
  %v142 = vld [vmem:[%s1] sm:$0xff]
  %v143 = vld [vmem:[%s1 + $0x8] sm:$0xff]
  %v144 = vld [vmem:[%s1 + $0x10] sm:$0xff]
  %v145 = vld [vmem:[%s1 + $0x18] sm:$0xff]
  %v146 = vld [vmem:[%s1 + $0x20] sm:$0xff]
  %v147 = vld [vmem:[%s1 + $0x28] sm:$0xff]
  %v148 = vld [vmem:[%s1 + $0x30] sm:$0xff]
  %v149 = vld [vmem:[%s1 + $0x38] sm:$0xff]
  %v150 = vld [vmem:[%s1 + $0x40] sm:$0xff]
  %v151 = vld [vmem:[%s1 + $0x48] sm:$0xff]
  %v152 = vld [vmem:[%s1 + $0x50] sm:$0xff]
  %v153 = vld [vmem:[%s1 + $0x58] sm:$0xff]
  %v154 = vld [vmem:[%s1 + $0x60] sm:$0xff]
  %v155 = vld [vmem:[%s1 + $0x68] sm:$0xff]
  %v156 = vld [vmem:[%s1 + $0x70] sm:$0xff]
  %v157 = vld [vmem:[%s1 + $0x78] sm:$0xff]
  %v158 = vld [vmem:[%s1 + $0x80] sm:$0xff]
  %v159 = vld [vmem:[%s1 + $0x88] sm:$0xff]
  %v160 = vld [vmem:[%s1 + $0x90] sm:$0xff]
  %v161 = vld [vmem:[%s1 + $0x98] sm:$0xff]
  %v162 = vld [vmem:[%s1 + $0xa0] sm:$0xff]
  %v163 = vld [vmem:[%s1 + $0xa8] sm:$0xff]
  %v164 = vld [vmem:[%s1 + $0xb0] sm:$0xff]
  %v165 = vld [vmem:[%s1 + $0xb8] sm:$0xff]
  %v166 = vld [vmem:[%s1 + $0xc0] sm:$0xff]
  %v167 = vld [vmem:[%s1 + $0xc8] sm:$0xff]
  %v168 = vld [vmem:[%s1 + $0xd0] sm:$0xff]
  %v169 = vld [vmem:[%s1 + $0xd8] sm:$0xff]
  %v170 = vld [vmem:[%s1 + $0xe0] sm:$0xff]
  %v171 = vld [vmem:[%s1 + $0xe8] sm:$0xff]
  %v172 = vld [vmem:[%s1 + $0xf0] sm:$0xff]
  %v173 = vld [vmem:[%s1 + $0xf8] sm:$0xff]
  %v174 = vld [vmem:[%s1 + $0x100] sm:$0xff]
  %v175 = vld [vmem:[%s1 + $0x108] sm:$0xff]
  %v176 = vld [vmem:[%s1 + $0x110] sm:$0xff]
  %v177 = vld [vmem:[%s1 + $0x118] sm:$0xff]
  %v178 = vld [vmem:[%s1 + $0x120] sm:$0xff]
  %v179 = vld [vmem:[%s1 + $0x128] sm:$0xff]
  %v180 = vld [vmem:[%s1 + $0x130] sm:$0xff]
  %v181 = vld [vmem:[%s1 + $0x138] sm:$0xff]
  %v182 = vld [vmem:[%s1 + $0x140] sm:$0xff]
  %v183 = vld [vmem:[%s1 + $0x148] sm:$0xff]
  %v184 = vld [vmem:[%s1 + $0x150] sm:$0xff]
  %v185 = vld [vmem:[%s1 + $0x158] sm:$0xff]
  %v186 = vld [vmem:[%s1 + $0x160] sm:$0xff]
  %v187 = vld [vmem:[%s1 + $0x168] sm:$0xff]
  %v188 = vld [vmem:[%s1 + $0x170] sm:$0xff]
  %v189 = vld [vmem:[%s1 + $0x178] sm:$0xff]
  %v190 = vld [vmem:[%s1 + $0x180] sm:$0xff]
  %v191 = vld [vmem:[%s1 + $0x188] sm:$0xff]
  %v192 = vld [vmem:[%s1 + $0x190] sm:$0xff]
  %v193 = vld [vmem:[%s1 + $0x198] sm:$0xff]
  %v194 = vld [vmem:[%s1 + $0x1a0] sm:$0xff]
  %v195 = vld [vmem:[%s1 + $0x1a8] sm:$0xff]
  %v196 = vld [vmem:[%s1 + $0x1b0] sm:$0xff]
  %v197 = vld [vmem:[%s1 + $0x1b8] sm:$0xff]
  %v198 = vld [vmem:[%s1 + $0x1c0] sm:$0xff]
  %v199 = vld [vmem:[%s1 + $0x1c8] sm:$0xff]
  %v200 = vld [vmem:[%s1 + $0x1d0] sm:$0xff]
  %v201 = vld [vmem:[%s1 + $0x1d8] sm:$0xff]
  %v202 = vld [vmem:[%s1 + $0x1e0] sm:$0xff]
  %v203 = vld [vmem:[%s1 + $0x1e8] sm:$0xff]
  %v204 = vld [vmem:[%s1 + $0x1f0] sm:$0xff]
  %v205 = vld [vmem:[%s1 + $0x1f8] sm:$0xff]
  %v206 = vld [vmem:[#allocation2] sm:$0xfe]
  %v207 = vld [vmem:[#allocation2 + $0x8] sm:$0xfe]
  %v208 = vld [vmem:[#allocation2 + $0x10] sm:$0x1]
  %v209 = vld [vmem:[#allocation2 + $0x18] sm:$0x1]
  %v210 = vld [vmem:[#allocation2 + $0x10] sm:$0xf8]
  %v211 = vld [vmem:[#allocation2 + $0x18] sm:$0xf8]
  %v212 = vld [vmem:[#allocation2 + $0x20] sm:$0x7]
  %v213 = vld [vmem:[#allocation2 + $0x28] sm:$0x7]
  %vm218 = vcmask 1046528
  %v219 = vrot.slane %v206, 1
  %v220 = vrot.slane %v208, 1
  %v221 = vsel %vm218, %v219, %v220
  %v222 = vrot.slane %v207, 1
  %v223 = vrot.slane %v209, 1
  %v224 = vsel %vm218, %v222, %v223
  %vm231 = vcmask 1044480
  %v232 = vrot.slane %v210, 3
  %v233 = vrot.slane %v212, 3
  %v234 = vsel %vm231, %v232, %v233
  %v235 = vrot.slane %v211, 3
  %v236 = vrot.slane %v213, 3
  %v237 = vsel %vm231, %v235, %v236
  %s240 = scalar_lea.vmem %s1, 512
  %v241 = vld [vmem:[%s240] sm:$0xff]
  %v242 = vld [vmem:[%s240 + $0x8] sm:$0xff]
  %v243 = vld [vmem:[%s240 + $0x10] sm:$0xff]
  %v244 = vld [vmem:[%s240 + $0x18] sm:$0xff]
  %v245 = vld [vmem:[%s240 + $0x20] sm:$0xff]
  %v246 = vld [vmem:[%s240 + $0x28] sm:$0xff]
  %v247 = vld [vmem:[%s240 + $0x30] sm:$0xff]
  %v248 = vld [vmem:[%s240 + $0x38] sm:$0xff]
  %v249 = vld [vmem:[%s240 + $0x40] sm:$0xff]
  %v250 = vld [vmem:[%s240 + $0x48] sm:$0xff]
  %v251 = vld [vmem:[%s240 + $0x50] sm:$0xff]
  %v252 = vld [vmem:[%s240 + $0x58] sm:$0xff]
  %v253 = vld [vmem:[%s240 + $0x60] sm:$0xff]
  %v254 = vld [vmem:[%s240 + $0x68] sm:$0xff]
  %v255 = vld [vmem:[%s240 + $0x70] sm:$0xff]
  %v256 = vld [vmem:[%s240 + $0x78] sm:$0xff]
  %v257 = vld [vmem:[%s240 + $0x80] sm:$0xff]
  %v258 = vld [vmem:[%s240 + $0x88] sm:$0xff]
  %v259 = vld [vmem:[%s240 + $0x90] sm:$0xff]
  %v260 = vld [vmem:[%s240 + $0x98] sm:$0xff]
  %v261 = vld [vmem:[%s240 + $0xa0] sm:$0xff]
  %v262 = vld [vmem:[%s240 + $0xa8] sm:$0xff]
  %v263 = vld [vmem:[%s240 + $0xb0] sm:$0xff]
  %v264 = vld [vmem:[%s240 + $0xb8] sm:$0xff]
  %v265 = vld [vmem:[%s240 + $0xc0] sm:$0xff]
  %v266 = vld [vmem:[%s240 + $0xc8] sm:$0xff]
  %v267 = vld [vmem:[%s240 + $0xd0] sm:$0xff]
  %v268 = vld [vmem:[%s240 + $0xd8] sm:$0xff]
  %v269 = vld [vmem:[%s240 + $0xe0] sm:$0xff]
  %v270 = vld [vmem:[%s240 + $0xe8] sm:$0xff]
  %v271 = vld [vmem:[%s240 + $0xf0] sm:$0xff]
  %v272 = vld [vmem:[%s240 + $0xf8] sm:$0xff]
  %v273 = vld [vmem:[%s240 + $0x100] sm:$0xff]
  %v274 = vld [vmem:[%s240 + $0x108] sm:$0xff]
  %v275 = vld [vmem:[%s240 + $0x110] sm:$0xff]
  %v276 = vld [vmem:[%s240 + $0x118] sm:$0xff]
  %v277 = vld [vmem:[%s240 + $0x120] sm:$0xff]
  %v278 = vld [vmem:[%s240 + $0x128] sm:$0xff]
  %v279 = vld [vmem:[%s240 + $0x130] sm:$0xff]
  %v280 = vld [vmem:[%s240 + $0x138] sm:$0xff]
  %v281 = vld [vmem:[%s240 + $0x140] sm:$0xff]
  %v282 = vld [vmem:[%s240 + $0x148] sm:$0xff]
  %v283 = vld [vmem:[%s240 + $0x150] sm:$0xff]
  %v284 = vld [vmem:[%s240 + $0x158] sm:$0xff]
  %v285 = vld [vmem:[%s240 + $0x160] sm:$0xff]
  %v286 = vld [vmem:[%s240 + $0x168] sm:$0xff]
  %v287 = vld [vmem:[%s240 + $0x170] sm:$0xff]
  %v288 = vld [vmem:[%s240 + $0x178] sm:$0xff]
  %v289 = vld [vmem:[%s240 + $0x180] sm:$0xff]
  %v290 = vld [vmem:[%s240 + $0x188] sm:$0xff]
  %v291 = vld [vmem:[%s240 + $0x190] sm:$0xff]
  %v292 = vld [vmem:[%s240 + $0x198] sm:$0xff]
  %v293 = vld [vmem:[%s240 + $0x1a0] sm:$0xff]
  %v294 = vld [vmem:[%s240 + $0x1a8] sm:$0xff]
  %v295 = vld [vmem:[%s240 + $0x1b0] sm:$0xff]
  %v296 = vld [vmem:[%s240 + $0x1b8] sm:$0xff]
  %v297 = vld [vmem:[%s240 + $0x1c0] sm:$0xff]
  %v298 = vld [vmem:[%s240 + $0x1c8] sm:$0xff]
  %v299 = vld [vmem:[%s240 + $0x1d0] sm:$0xff]
  %v300 = vld [vmem:[%s240 + $0x1d8] sm:$0xff]
  %v301 = vld [vmem:[%s240 + $0x1e0] sm:$0xff]
  %v302 = vld [vmem:[%s240 + $0x1e8] sm:$0xff]
  %v303 = vld [vmem:[%s240 + $0x1f0] sm:$0xff]
  %v304 = vld [vmem:[%s240 + $0x1f8] sm:$0xff]
  %305 = vmatprep.subr.mxu0 %v242
  %306 = vmatpush1.msra.mxu0 %v241
  %307 = vmatprep.subr.mxu0 %v244
  %308 = vmatpush1.msra.mxu0 %v243
  %309 = vmatprep.subr.mxu0 %v246
  %310 = vmatpush1.msra.mxu0 %v245
  %311 = vmatprep.subr.mxu0 %v248
  %312 = vmatpush1.msra.mxu0 %v247
  %313 = vmatprep.subr.mxu0 %v250
  %314 = vmatpush1.msra.mxu0 %v249
  %315 = vmatprep.subr.mxu0 %v252
  %316 = vmatpush1.msra.mxu0 %v251
  %317 = vmatprep.subr.mxu0 %v254
  %318 = vmatpush1.msra.mxu0 %v253
  %319 = vmatprep.subr.mxu0 %v256
  %320 = vmatpush1.msra.mxu0 %v255
  %321 = vmatprep.subr.mxu0 %v258
  %322 = vmatpush1.msra.mxu0 %v257
  %323 = vmatprep.subr.mxu0 %v260
  %324 = vmatpush1.msra.mxu0 %v259
  %325 = vmatprep.subr.mxu0 %v262
  %326 = vmatpush1.msra.mxu0 %v261
  %327 = vmatprep.subr.mxu0 %v264
  %328 = vmatpush1.msra.mxu0 %v263
  %329 = vmatprep.subr.mxu0 %v266
  %330 = vmatpush1.msra.mxu0 %v265
  %331 = vmatprep.subr.mxu0 %v268
  %332 = vmatpush1.msra.mxu0 %v267
  %333 = vmatprep.subr.mxu0 %v270
  %334 = vmatpush1.msra.mxu0 %v269
  %335 = vmatprep.subr.mxu0 %v272
  %336 = vmatpush1.msra.mxu0 %v271
  %337 = vmatprep.subr.mxu0 %v274
  %338 = vmatpush1.msra.mxu0 %v273
  %339 = vmatprep.subr.mxu0 %v276
  %340 = vmatpush1.msra.mxu0 %v275
  %341 = vmatprep.subr.mxu0 %v278
  %342 = vmatpush1.msra.mxu0 %v277
  %343 = vmatprep.subr.mxu0 %v280
  %344 = vmatpush1.msra.mxu0 %v279
  %345 = vmatprep.subr.mxu0 %v282
  %346 = vmatpush1.msra.mxu0 %v281
  %347 = vmatprep.subr.mxu0 %v284
  %348 = vmatpush1.msra.mxu0 %v283
  %349 = vmatprep.subr.mxu0 %v286
  %350 = vmatpush1.msra.mxu0 %v285
  %351 = vmatprep.subr.mxu0 %v288
  %352 = vmatpush1.msra.mxu0 %v287
  %353 = vmatprep.subr.mxu0 %v290
  %354 = vmatpush1.msra.mxu0 %v289
  %355 = vmatprep.subr.mxu0 %v292
  %356 = vmatpush1.msra.mxu0 %v291
  %357 = vmatprep.subr.mxu0 %v294
  %358 = vmatpush1.msra.mxu0 %v293
  %359 = vmatprep.subr.mxu0 %v296
  %360 = vmatpush1.msra.mxu0 %v295
  %361 = vmatprep.subr.mxu0 %v298
  %362 = vmatpush1.msra.mxu0 %v297
  %363 = vmatprep.subr.mxu0 %v300
  %364 = vmatpush1.msra.mxu0 %v299
  %365 = vmatprep.subr.mxu0 %v302
  %366 = vmatpush1.msra.mxu0 %v301
  %367 = vmatprep.subr.mxu0 %v304
  %368 = vmatpush1.msra.mxu0 %v303
  %369 = vmatprep.mubr.f32.mxu0 %v224
  %370 = vmatmul.mubr.f32.gmra.mrb[0].mxu0 %v221
  %v371 = vpop.f32.mrb[0].mxu0
  %v372 = vadd.f32 0.0, %v371
  %v373 = vpop.f32.mrb[0].mxu0
  %v374 = vadd.f32 0.0, %v373
  %375 = vmatprep.mubr.f32.mxu0 %v237
  %376 = vmatmul.mubr.f32.gmra.mrb[0].mxu0 %v234
  %v377 = vpop.f32.mrb[0].mxu0
  %v378 = vadd.f32 0.0, %v377
  %v379 = vpop.f32.mrb[0].mxu0
  %v380 = vadd.f32 0.0, %v379
  %381 = vdwg.mxu0
  %382 = vmatprep.subr.mxu0 %v143
  %383 = vmatpush1.msra.mxu0 %v142
  %384 = vmatprep.subr.mxu0 %v145
  %385 = vmatpush1.msra.mxu0 %v144
  %386 = vmatprep.subr.mxu0 %v147
  %387 = vmatpush1.msra.mxu0 %v146
  %388 = vmatprep.subr.mxu0 %v149
  %389 = vmatpush1.msra.mxu0 %v148
  %390 = vmatprep.subr.mxu0 %v151
  %391 = vmatpush1.msra.mxu0 %v150
  %392 = vmatprep.subr.mxu0 %v153
  %393 = vmatpush1.msra.mxu0 %v152
  %394 = vmatprep.subr.mxu0 %v155
  %395 = vmatpush1.msra.mxu0 %v154
  %396 = vmatprep.subr.mxu0 %v157
  %397 = vmatpush1.msra.mxu0 %v156
  %398 = vmatprep.subr.mxu0 %v159
  %399 = vmatpush1.msra.mxu0 %v158
  %400 = vmatprep.subr.mxu0 %v161
  %401 = vmatpush1.msra.mxu0 %v160
  %402 = vmatprep.subr.mxu0 %v163
  %403 = vmatpush1.msra.mxu0 %v162
  %404 = vmatprep.subr.mxu0 %v165
  %405 = vmatpush1.msra.mxu0 %v164
  %406 = vmatprep.subr.mxu0 %v167
  %407 = vmatpush1.msra.mxu0 %v166
  %408 = vmatprep.subr.mxu0 %v169
  %409 = vmatpush1.msra.mxu0 %v168
  %410 = vmatprep.subr.mxu0 %v171
  %411 = vmatpush1.msra.mxu0 %v170
  %412 = vmatprep.subr.mxu0 %v173
  %413 = vmatpush1.msra.mxu0 %v172
  %414 = vmatprep.subr.mxu0 %v175
  %415 = vmatpush1.msra.mxu0 %v174
  %416 = vmatprep.subr.mxu0 %v177
  %417 = vmatpush1.msra.mxu0 %v176
  %418 = vmatprep.subr.mxu0 %v179
  %419 = vmatpush1.msra.mxu0 %v178
  %420 = vmatprep.subr.mxu0 %v181
  %421 = vmatpush1.msra.mxu0 %v180
  %422 = vmatprep.subr.mxu0 %v183
  %423 = vmatpush1.msra.mxu0 %v182
  %424 = vmatprep.subr.mxu0 %v185
  %425 = vmatpush1.msra.mxu0 %v184
  %426 = vmatprep.subr.mxu0 %v187
  %427 = vmatpush1.msra.mxu0 %v186
  %428 = vmatprep.subr.mxu0 %v189
  %429 = vmatpush1.msra.mxu0 %v188
  %430 = vmatprep.subr.mxu0 %v191
  %431 = vmatpush1.msra.mxu0 %v190
  %432 = vmatprep.subr.mxu0 %v193
  %433 = vmatpush1.msra.mxu0 %v192
  %434 = vmatprep.subr.mxu0 %v195
  %435 = vmatpush1.msra.mxu0 %v194
  %436 = vmatprep.subr.mxu0 %v197
  %437 = vmatpush1.msra.mxu0 %v196
  %438 = vmatprep.subr.mxu0 %v199
  %439 = vmatpush1.msra.mxu0 %v198
  %440 = vmatprep.subr.mxu0 %v201
  %441 = vmatpush1.msra.mxu0 %v200
  %442 = vmatprep.subr.mxu0 %v203
  %443 = vmatpush1.msra.mxu0 %v202
  %444 = vmatprep.subr.mxu0 %v205
  %445 = vmatpush1.msra.mxu0 %v204
  %446 = vmatprep.mubr.f32.mxu0 %v124
  %447 = vmatmul.mubr.f32.gmra.mrb[0].mxu0 %v123
  %v448 = vpop.f32.mrb[0].mxu0
  %v449 = vadd.f32 %v372, %v448
  %v450 = vpop.f32.mrb[0].mxu0
  %v451 = vadd.f32 %v374, %v450
  %452 = vmatprep.mubr.f32.mxu0 %v139
  %453 = vmatmul.mubr.f32.gmra.mrb[0].mxu0 %v136
  %v454 = vpop.f32.mrb[0].mxu0
  %v455 = vadd.f32 %v378, %v454
  %v456 = vpop.f32.mrb[0].mxu0
  %v457 = vadd.f32 %v380, %v456
  %458 = vdwg.mxu0
  %v459 = vld [vmem:[#allocation2] sm:$0xfc]
  %v460 = vld [vmem:[#allocation2 + $0x8] sm:$0xfc]
  %v461 = vld [vmem:[#allocation2 + $0x10] sm:$0x3]
  %v462 = vld [vmem:[#allocation2 + $0x18] sm:$0x3]
  %v463 = vld [vmem:[#allocation2 + $0x10] sm:$0xf0]
  %v464 = vld [vmem:[#allocation2 + $0x18] sm:$0xf0]
  %v465 = vld [vmem:[#allocation2 + $0x20] sm:$0xf]
  %v466 = vld [vmem:[#allocation2 + $0x28] sm:$0xf]
  %v471 = vrot.slane %v459, 2
  %v472 = vrot.slane %v461, 2
  %v473 = vsel %vm133, %v471, %v472
  %v474 = vrot.slane %v460, 2
  %v475 = vrot.slane %v462, 2
  %v476 = vsel %vm133, %v474, %v475
  %vm483 = vcmask 1043456
  %v484 = vrot.slane %v463, 4
  %v485 = vrot.slane %v465, 4
  %v486 = vsel %vm483, %v484, %v485
  %v487 = vrot.slane %v464, 4
  %v488 = vrot.slane %v466, 4
  %v489 = vsel %vm483, %v487, %v488
  %s492 = scalar_lea.vmem %s1, 1024
  %v493 = vld [vmem:[%s492] sm:$0xff]
  %v494 = vld [vmem:[%s492 + $0x8] sm:$0xff]
  %v495 = vld [vmem:[%s492 + $0x10] sm:$0xff]
  %v496 = vld [vmem:[%s492 + $0x18] sm:$0xff]
  %v497 = vld [vmem:[%s492 + $0x20] sm:$0xff]
  %v498 = vld [vmem:[%s492 + $0x28] sm:$0xff]
  %v499 = vld [vmem:[%s492 + $0x30] sm:$0xff]
  %v500 = vld [vmem:[%s492 + $0x38] sm:$0xff]
  %v501 = vld [vmem:[%s492 + $0x40] sm:$0xff]
  %v502 = vld [vmem:[%s492 + $0x48] sm:$0xff]
  %v503 = vld [vmem:[%s492 + $0x50] sm:$0xff]
  %v504 = vld [vmem:[%s492 + $0x58] sm:$0xff]
  %v505 = vld [vmem:[%s492 + $0x60] sm:$0xff]
  %v506 = vld [vmem:[%s492 + $0x68] sm:$0xff]
  %v507 = vld [vmem:[%s492 + $0x70] sm:$0xff]
  %v508 = vld [vmem:[%s492 + $0x78] sm:$0xff]
  %v509 = vld [vmem:[%s492 + $0x80] sm:$0xff]
  %v510 = vld [vmem:[%s492 + $0x88] sm:$0xff]
  %v511 = vld [vmem:[%s492 + $0x90] sm:$0xff]
  %v512 = vld [vmem:[%s492 + $0x98] sm:$0xff]
  %v513 = vld [vmem:[%s492 + $0xa0] sm:$0xff]
  %v514 = vld [vmem:[%s492 + $0xa8] sm:$0xff]
  %v515 = vld [vmem:[%s492 + $0xb0] sm:$0xff]
  %v516 = vld [vmem:[%s492 + $0xb8] sm:$0xff]
  %v517 = vld [vmem:[%s492 + $0xc0] sm:$0xff]
  %v518 = vld [vmem:[%s492 + $0xc8] sm:$0xff]
  %v519 = vld [vmem:[%s492 + $0xd0] sm:$0xff]
  %v520 = vld [vmem:[%s492 + $0xd8] sm:$0xff]
  %v521 = vld [vmem:[%s492 + $0xe0] sm:$0xff]
  %v522 = vld [vmem:[%s492 + $0xe8] sm:$0xff]
  %v523 = vld [vmem:[%s492 + $0xf0] sm:$0xff]
  %v524 = vld [vmem:[%s492 + $0xf8] sm:$0xff]
  %v525 = vld [vmem:[%s492 + $0x100] sm:$0xff]
  %v526 = vld [vmem:[%s492 + $0x108] sm:$0xff]
  %v527 = vld [vmem:[%s492 + $0x110] sm:$0xff]
  %v528 = vld [vmem:[%s492 + $0x118] sm:$0xff]
  %v529 = vld [vmem:[%s492 + $0x120] sm:$0xff]
  %v530 = vld [vmem:[%s492 + $0x128] sm:$0xff]
  %v531 = vld [vmem:[%s492 + $0x130] sm:$0xff]
  %v532 = vld [vmem:[%s492 + $0x138] sm:$0xff]
  %v533 = vld [vmem:[%s492 + $0x140] sm:$0xff]
  %v534 = vld [vmem:[%s492 + $0x148] sm:$0xff]
  %v535 = vld [vmem:[%s492 + $0x150] sm:$0xff]
  %v536 = vld [vmem:[%s492 + $0x158] sm:$0xff]
  %v537 = vld [vmem:[%s492 + $0x160] sm:$0xff]
  %v538 = vld [vmem:[%s492 + $0x168] sm:$0xff]
  %v539 = vld [vmem:[%s492 + $0x170] sm:$0xff]
  %v540 = vld [vmem:[%s492 + $0x178] sm:$0xff]
  %v541 = vld [vmem:[%s492 + $0x180] sm:$0xff]
  %v542 = vld [vmem:[%s492 + $0x188] sm:$0xff]
  %v543 = vld [vmem:[%s492 + $0x190] sm:$0xff]
  %v544 = vld [vmem:[%s492 + $0x198] sm:$0xff]
  %v545 = vld [vmem:[%s492 + $0x1a0] sm:$0xff]
  %v546 = vld [vmem:[%s492 + $0x1a8] sm:$0xff]
  %v547 = vld [vmem:[%s492 + $0x1b0] sm:$0xff]
  %v548 = vld [vmem:[%s492 + $0x1b8] sm:$0xff]
  %v549 = vld [vmem:[%s492 + $0x1c0] sm:$0xff]
  %v550 = vld [vmem:[%s492 + $0x1c8] sm:$0xff]
  %v551 = vld [vmem:[%s492 + $0x1d0] sm:$0xff]
  %v552 = vld [vmem:[%s492 + $0x1d8] sm:$0xff]
  %v553 = vld [vmem:[%s492 + $0x1e0] sm:$0xff]
  %v554 = vld [vmem:[%s492 + $0x1e8] sm:$0xff]
  %v555 = vld [vmem:[%s492 + $0x1f0] sm:$0xff]
  %v556 = vld [vmem:[%s492 + $0x1f8] sm:$0xff]
  %557 = vmatprep.subr.mxu0 %v494
  %558 = vmatpush1.msra.mxu0 %v493
  %559 = vmatprep.subr.mxu0 %v496
  %560 = vmatpush1.msra.mxu0 %v495
  %561 = vmatprep.subr.mxu0 %v498
  %562 = vmatpush1.msra.mxu0 %v497
  %563 = vmatprep.subr.mxu0 %v500
  %564 = vmatpush1.msra.mxu0 %v499
  %565 = vmatprep.subr.mxu0 %v502
  %566 = vmatpush1.msra.mxu0 %v501
  %567 = vmatprep.subr.mxu0 %v504
  %568 = vmatpush1.msra.mxu0 %v503
  %569 = vmatprep.subr.mxu0 %v506
  %570 = vmatpush1.msra.mxu0 %v505
  %571 = vmatprep.subr.mxu0 %v508
  %572 = vmatpush1.msra.mxu0 %v507
  %573 = vmatprep.subr.mxu0 %v510
  %574 = vmatpush1.msra.mxu0 %v509
  %575 = vmatprep.subr.mxu0 %v512
  %576 = vmatpush1.msra.mxu0 %v511
  %577 = vmatprep.subr.mxu0 %v514
  %578 = vmatpush1.msra.mxu0 %v513
  %579 = vmatprep.subr.mxu0 %v516
  %580 = vmatpush1.msra.mxu0 %v515
  %581 = vmatprep.subr.mxu0 %v518
  %582 = vmatpush1.msra.mxu0 %v517
  %583 = vmatprep.subr.mxu0 %v520
  %584 = vmatpush1.msra.mxu0 %v519
  %585 = vmatprep.subr.mxu0 %v522
  %586 = vmatpush1.msra.mxu0 %v521
  %587 = vmatprep.subr.mxu0 %v524
  %588 = vmatpush1.msra.mxu0 %v523
  %589 = vmatprep.subr.mxu0 %v526
  %590 = vmatpush1.msra.mxu0 %v525
  %591 = vmatprep.subr.mxu0 %v528
  %592 = vmatpush1.msra.mxu0 %v527
  %593 = vmatprep.subr.mxu0 %v530
  %594 = vmatpush1.msra.mxu0 %v529
  %595 = vmatprep.subr.mxu0 %v532
  %596 = vmatpush1.msra.mxu0 %v531
  %597 = vmatprep.subr.mxu0 %v534
  %598 = vmatpush1.msra.mxu0 %v533
  %599 = vmatprep.subr.mxu0 %v536
  %600 = vmatpush1.msra.mxu0 %v535
  %601 = vmatprep.subr.mxu0 %v538
  %602 = vmatpush1.msra.mxu0 %v537
  %603 = vmatprep.subr.mxu0 %v540
  %604 = vmatpush1.msra.mxu0 %v539
  %605 = vmatprep.subr.mxu0 %v542
  %606 = vmatpush1.msra.mxu0 %v541
  %607 = vmatprep.subr.mxu0 %v544
  %608 = vmatpush1.msra.mxu0 %v543
  %609 = vmatprep.subr.mxu0 %v546
  %610 = vmatpush1.msra.mxu0 %v545
  %611 = vmatprep.subr.mxu0 %v548
  %612 = vmatpush1.msra.mxu0 %v547
  %613 = vmatprep.subr.mxu0 %v550
  %614 = vmatpush1.msra.mxu0 %v549
  %615 = vmatprep.subr.mxu0 %v552
  %616 = vmatpush1.msra.mxu0 %v551
  %617 = vmatprep.subr.mxu0 %v554
  %618 = vmatpush1.msra.mxu0 %v553
  %619 = vmatprep.subr.mxu0 %v556
  %620 = vmatpush1.msra.mxu0 %v555
  %621 = vmatprep.mubr.f32.mxu0 %v476
  %622 = vmatmul.mubr.f32.gmra.mrb[0].mxu0 %v473
  %v623 = vpop.f32.mrb[0].mxu0
  %v624 = vadd.f32 0.0, %v623
  %v625 = vpop.f32.mrb[0].mxu0
  %v626 = vadd.f32 0.0, %v625
  %627 = vmatprep.mubr.f32.mxu0 %v489
  %628 = vmatmul.mubr.f32.gmra.mrb[0].mxu0 %v486
  %v629 = vpop.f32.mrb[0].mxu0
  %v630 = vadd.f32 0.0, %v629
  %v631 = vpop.f32.mrb[0].mxu0
  %v632 = vadd.f32 0.0, %v631
  %633 = vdwg.mxu0
  %v634 = vadd.f32 %v449, %v624
  %v635 = vadd.f32 %v451, %v626
  %v636 = vadd.f32 %v455, %v630
  %v637 = vadd.f32 %v457, %v632
  %v638 = vld [vmem:[%s2] sm:$0x3]
  %v639 = vld [vmem:[%s3] sm:$0x3]
  %vm640 = vcmask 130048
  %v642 = vsel %vm640, 1.0, 0
  %644 = vmatprep.subr.mxu0 %v635
  %645 = vmatpush1.msra.mxu0 %v634
  %646 = vmatprep.subr.mxu0 %v637
  %647 = vmatpush1.msra.mxu0 %v636
  %648 = vmatprep.subr.mxu0 0.0
  %649 = vmatpush1.msra.mxu0 0.0
  %650 = vmatprep.subr.mxu0 0.0
  %651 = vmatpush1.msra.mxu0 0.0
  %652 = vmatprep.subr.mxu0 0.0
  %653 = vmatpush1.msra.mxu0 0.0
  %654 = vmatprep.subr.mxu0 0.0
  %655 = vmatpush1.msra.mxu0 0.0
  %656 = vmatprep.subr.mxu0 0.0
  %657 = vmatpush1.msra.mxu0 0.0
  %658 = vmatprep.subr.mxu0 0.0
  %659 = vmatpush1.msra.mxu0 0.0
  %660 = vmatprep.subr.mxu0 0.0
  %661 = vmatpush1.msra.mxu0 0.0
  %662 = vmatprep.subr.mxu0 0.0
  %663 = vmatpush1.msra.mxu0 0.0
  %664 = vmatprep.subr.mxu0 0.0
  %665 = vmatpush1.msra.mxu0 0.0
  %666 = vmatprep.subr.mxu0 0.0
  %667 = vmatpush1.msra.mxu0 0.0
  %668 = vmatprep.subr.mxu0 0.0
  %669 = vmatpush1.msra.mxu0 0.0
  %670 = vmatprep.subr.mxu0 0.0
  %671 = vmatpush1.msra.mxu0 0.0
  %672 = vmatprep.subr.mxu0 0.0
  %673 = vmatpush1.msra.mxu0 0.0
  %674 = vmatprep.subr.mxu0 0.0
  %675 = vmatpush1.msra.mxu0 0.0
  %676 = vmatprep.subr.mxu0 0.0
  %677 = vmatpush1.msra.mxu0 0.0
  %678 = vmatprep.subr.mxu0 0.0
  %679 = vmatpush1.msra.mxu0 0.0
  %680 = vmatprep.subr.mxu0 0.0
  %681 = vmatpush1.msra.mxu0 0.0
  %682 = vmatprep.subr.mxu0 0.0
  %683 = vmatpush1.msra.mxu0 0.0
  %684 = vmatprep.subr.mxu0 0.0
  %685 = vmatpush1.msra.mxu0 0.0
  %686 = vmatprep.subr.mxu0 0.0
  %687 = vmatpush1.msra.mxu0 0.0
  %688 = vmatprep.subr.mxu0 0.0
  %689 = vmatpush1.msra.mxu0 0.0
  %690 = vmatprep.subr.mxu0 0.0
  %691 = vmatpush1.msra.mxu0 0.0
  %692 = vmatprep.subr.mxu0 0.0
  %693 = vmatpush1.msra.mxu0 0.0
  %694 = vmatprep.subr.mxu0 0.0
  %695 = vmatpush1.msra.mxu0 0.0
  %696 = vmatprep.subr.mxu0 0.0
  %697 = vmatpush1.msra.mxu0 0.0
  %698 = vmatprep.subr.mxu0 0.0
  %699 = vmatpush1.msra.mxu0 0.0
  %700 = vmatprep.subr.mxu0 0.0
  %701 = vmatpush1.msra.mxu0 0.0
  %702 = vmatprep.subr.mxu0 0.0
  %703 = vmatpush1.msra.mxu0 0.0
  %704 = vmatprep.subr.mxu0 0.0
  %705 = vmatpush1.msra.mxu0 0.0
  %706 = vmatprep.subr.mxu0 0.0
  %707 = vmatpush1.msra.mxu0 0.0
  %708 = vmatprep.mubr.f32.mxu0 0.0
  %709 = vmatmul.mubr.f32.gmra.mrb[0].mxu0 %v642
  %v710 = vpop.f32.mrb[0].mxu0
  %v711 = vadd.f32 0.0, %v710
  %v712 = vpop.f32.mrb[0].mxu0
  %v713 = vadd.f32 0.0, %v712
  %714 = vdwg.mxu0
  %715 = vmatprep.subr.mxu0 %v34
  %716 = vmatpush1.msra.mxu0 %v33
  %717 = vmatprep.subr.mxu0 %v36
  %718 = vmatpush1.msra.mxu0 %v35
  %719 = vmatprep.subr.mxu0 %v38
  %720 = vmatpush1.msra.mxu0 %v37
  %721 = vmatprep.subr.mxu0 %v40
  %722 = vmatpush1.msra.mxu0 %v39
  %723 = vmatprep.subr.mxu0 %v42
  %724 = vmatpush1.msra.mxu0 %v41
  %725 = vmatprep.subr.mxu0 %v44
  %726 = vmatpush1.msra.mxu0 %v43
  %727 = vmatprep.subr.mxu0 %v46
  %728 = vmatpush1.msra.mxu0 %v45
  %729 = vmatprep.subr.mxu0 %v48
  %730 = vmatpush1.msra.mxu0 %v47
  %731 = vmatprep.subr.mxu0 %v50
  %732 = vmatpush1.msra.mxu0 %v49
  %733 = vmatprep.subr.mxu0 %v52
  %734 = vmatpush1.msra.mxu0 %v51
  %735 = vmatprep.subr.mxu0 %v54
  %736 = vmatpush1.msra.mxu0 %v53
  %737 = vmatprep.subr.mxu0 %v56
  %738 = vmatpush1.msra.mxu0 %v55
  %739 = vmatprep.subr.mxu0 %v58
  %740 = vmatpush1.msra.mxu0 %v57
  %741 = vmatprep.subr.mxu0 %v60
  %742 = vmatpush1.msra.mxu0 %v59
  %743 = vmatprep.subr.mxu0 %v62
  %744 = vmatpush1.msra.mxu0 %v61
  %745 = vmatprep.subr.mxu0 %v64
  %746 = vmatpush1.msra.mxu0 %v63
  %747 = vmatprep.subr.mxu0 %v66
  %748 = vmatpush1.msra.mxu0 %v65
  %749 = vmatprep.subr.mxu0 %v68
  %750 = vmatpush1.msra.mxu0 %v67
  %751 = vmatprep.subr.mxu0 %v70
  %752 = vmatpush1.msra.mxu0 %v69
  %753 = vmatprep.subr.mxu0 %v72
  %754 = vmatpush1.msra.mxu0 %v71
  %755 = vmatprep.subr.mxu0 %v74
  %756 = vmatpush1.msra.mxu0 %v73
  %757 = vmatprep.subr.mxu0 %v76
  %758 = vmatpush1.msra.mxu0 %v75
  %759 = vmatprep.subr.mxu0 %v78
  %760 = vmatpush1.msra.mxu0 %v77
  %761 = vmatprep.subr.mxu0 %v80
  %762 = vmatpush1.msra.mxu0 %v79
  %763 = vmatprep.subr.mxu0 %v82
  %764 = vmatpush1.msra.mxu0 %v81
  %765 = vmatprep.subr.mxu0 %v84
  %766 = vmatpush1.msra.mxu0 %v83
  %767 = vmatprep.subr.mxu0 %v86
  %768 = vmatpush1.msra.mxu0 %v85
  %769 = vmatprep.subr.mxu0 %v88
  %770 = vmatpush1.msra.mxu0 %v87
  %771 = vmatprep.subr.mxu0 %v90
  %772 = vmatpush1.msra.mxu0 %v89
  %773 = vmatprep.subr.mxu0 %v92
  %774 = vmatpush1.msra.mxu0 %v91
  %775 = vmatprep.subr.mxu0 %v94
  %776 = vmatpush1.msra.mxu0 %v93
  %777 = vmatprep.subr.mxu0 %v96
  %778 = vmatpush1.msra.mxu0 %v95
  %779 = vmatprep.mubr.f32.mxu0 %v713
  %780 = vmatmul.mubr.f32.gmra.mrb[0].mxu0 %v711
  %v781 = vpop.f32.mrb[0].mxu0
  %v782 = vadd.f32 0.0, %v781
  %v783 = vpop.f32.mrb[0].mxu0
  %v784 = vadd.f32 0.0, %v783
  %785 = vdwg.mxu0
  %v786 = vmul.f32 %v782, 0.0078125
  %v787 = vmul.f32 %v784, 0.0078125
  %v788 = vlaneseq
  %v789 = vshrl.u32 %v788, 7
  %v790 = vsub.s32 0, %v789
  %v791 = vrot.slane %v786, %v790
  %v792 = vlaneseq
  %v793 = vshrl.u32 %v792, 7
  %v794 = vsub.s32 0, %v793
  %v795 = vrot.slane %v787, %v794
  %v796 = vsub.f32 %v634, %v791
  %v797 = vsub.f32 %v635, %v795
  %v798 = vsub.f32 %v636, %v791
  %v799 = vsub.f32 %v637, %v795
  %v800 = vmul.f32 %v796, %v796
  %v801 = vmul.f32 %v797, %v797
  %v802 = vmul.f32 %v798, %v798
  %v803 = vmul.f32 %v799, %v799
  %804 = vmatprep.subr.mxu0 %v801
  %805 = vmatpush1.msra.mxu0 %v800
  %806 = vmatprep.subr.mxu0 %v803
  %807 = vmatpush1.msra.mxu0 %v802
  %808 = vmatprep.subr.mxu0 0.0
  %809 = vmatpush1.msra.mxu0 0.0
  %810 = vmatprep.subr.mxu0 0.0
  %811 = vmatpush1.msra.mxu0 0.0
  %812 = vmatprep.subr.mxu0 0.0
  %813 = vmatpush1.msra.mxu0 0.0
  %814 = vmatprep.subr.mxu0 0.0
  %815 = vmatpush1.msra.mxu0 0.0
  %816 = vmatprep.subr.mxu0 0.0
  %817 = vmatpush1.msra.mxu0 0.0
  %818 = vmatprep.subr.mxu0 0.0
  %819 = vmatpush1.msra.mxu0 0.0
  %820 = vmatprep.subr.mxu0 0.0
  %821 = vmatpush1.msra.mxu0 0.0
  %822 = vmatprep.subr.mxu0 0.0
  %823 = vmatpush1.msra.mxu0 0.0
  %824 = vmatprep.subr.mxu0 0.0
  %825 = vmatpush1.msra.mxu0 0.0
  %826 = vmatprep.subr.mxu0 0.0
  %827 = vmatpush1.msra.mxu0 0.0
  %828 = vmatprep.subr.mxu0 0.0
  %829 = vmatpush1.msra.mxu0 0.0
  %830 = vmatprep.subr.mxu0 0.0
  %831 = vmatpush1.msra.mxu0 0.0
  %832 = vmatprep.subr.mxu0 0.0
  %833 = vmatpush1.msra.mxu0 0.0
  %834 = vmatprep.subr.mxu0 0.0
  %835 = vmatpush1.msra.mxu0 0.0
  %836 = vmatprep.subr.mxu0 0.0
  %837 = vmatpush1.msra.mxu0 0.0
  %838 = vmatprep.subr.mxu0 0.0
  %839 = vmatpush1.msra.mxu0 0.0
  %840 = vmatprep.subr.mxu0 0.0
  %841 = vmatpush1.msra.mxu0 0.0
  %842 = vmatprep.subr.mxu0 0.0
  %843 = vmatpush1.msra.mxu0 0.0
  %844 = vmatprep.subr.mxu0 0.0
  %845 = vmatpush1.msra.mxu0 0.0
  %846 = vmatprep.subr.mxu0 0.0
  %847 = vmatpush1.msra.mxu0 0.0
  %848 = vmatprep.subr.mxu0 0.0
  %849 = vmatpush1.msra.mxu0 0.0
  %850 = vmatprep.subr.mxu0 0.0
  %851 = vmatpush1.msra.mxu0 0.0
  %852 = vmatprep.subr.mxu0 0.0
  %853 = vmatpush1.msra.mxu0 0.0
  %854 = vmatprep.subr.mxu0 0.0
  %855 = vmatpush1.msra.mxu0 0.0
  %856 = vmatprep.subr.mxu0 0.0
  %857 = vmatpush1.msra.mxu0 0.0
  %858 = vmatprep.subr.mxu0 0.0
  %859 = vmatpush1.msra.mxu0 0.0
  %860 = vmatprep.subr.mxu0 0.0
  %861 = vmatpush1.msra.mxu0 0.0
  %862 = vmatprep.subr.mxu0 0.0
  %863 = vmatpush1.msra.mxu0 0.0
  %864 = vmatprep.subr.mxu0 0.0
  %865 = vmatpush1.msra.mxu0 0.0
  %866 = vmatprep.subr.mxu0 0.0
  %867 = vmatpush1.msra.mxu0 0.0
  %868 = vmatprep.mubr.f32.mxu0 0.0
  %869 = vmatmul.mubr.f32.gmra.mrb[0].mxu0 %v642
  %v870 = vpop.f32.mrb[0].mxu0
  %v871 = vadd.f32 0.0, %v870
  %v872 = vpop.f32.mrb[0].mxu0
  %v873 = vadd.f32 0.0, %v872
  %874 = vdwg.mxu0
  %875 = vmatprep.subr.mxu0 %v34
  %876 = vmatpush1.msra.mxu0 %v33
  %877 = vmatprep.subr.mxu0 %v36
  %878 = vmatpush1.msra.mxu0 %v35
  %879 = vmatprep.subr.mxu0 %v38
  %880 = vmatpush1.msra.mxu0 %v37
  %881 = vmatprep.subr.mxu0 %v40
  %882 = vmatpush1.msra.mxu0 %v39
  %883 = vmatprep.subr.mxu0 %v42
  %884 = vmatpush1.msra.mxu0 %v41
  %885 = vmatprep.subr.mxu0 %v44
  %886 = vmatpush1.msra.mxu0 %v43
  %887 = vmatprep.subr.mxu0 %v46
  %888 = vmatpush1.msra.mxu0 %v45
  %889 = vmatprep.subr.mxu0 %v48
  %890 = vmatpush1.msra.mxu0 %v47
  %891 = vmatprep.subr.mxu0 %v50
  %892 = vmatpush1.msra.mxu0 %v49
  %893 = vmatprep.subr.mxu0 %v52
  %894 = vmatpush1.msra.mxu0 %v51
  %895 = vmatprep.subr.mxu0 %v54
  %896 = vmatpush1.msra.mxu0 %v53
  %897 = vmatprep.subr.mxu0 %v56
  %898 = vmatpush1.msra.mxu0 %v55
  %899 = vmatprep.subr.mxu0 %v58
  %900 = vmatpush1.msra.mxu0 %v57
  %901 = vmatprep.subr.mxu0 %v60
  %902 = vmatpush1.msra.mxu0 %v59
  %903 = vmatprep.subr.mxu0 %v62
  %904 = vmatpush1.msra.mxu0 %v61
  %905 = vmatprep.subr.mxu0 %v64
  %906 = vmatpush1.msra.mxu0 %v63
  %907 = vmatprep.subr.mxu0 %v66
  %908 = vmatpush1.msra.mxu0 %v65
  %909 = vmatprep.subr.mxu0 %v68
  %910 = vmatpush1.msra.mxu0 %v67
  %911 = vmatprep.subr.mxu0 %v70
  %912 = vmatpush1.msra.mxu0 %v69
  %913 = vmatprep.subr.mxu0 %v72
  %914 = vmatpush1.msra.mxu0 %v71
  %915 = vmatprep.subr.mxu0 %v74
  %916 = vmatpush1.msra.mxu0 %v73
  %917 = vmatprep.subr.mxu0 %v76
  %918 = vmatpush1.msra.mxu0 %v75
  %919 = vmatprep.subr.mxu0 %v78
  %920 = vmatpush1.msra.mxu0 %v77
  %921 = vmatprep.subr.mxu0 %v80
  %922 = vmatpush1.msra.mxu0 %v79
  %923 = vmatprep.subr.mxu0 %v82
  %924 = vmatpush1.msra.mxu0 %v81
  %925 = vmatprep.subr.mxu0 %v84
  %926 = vmatpush1.msra.mxu0 %v83
  %927 = vmatprep.subr.mxu0 %v86
  %928 = vmatpush1.msra.mxu0 %v85
  %929 = vmatprep.subr.mxu0 %v88
  %930 = vmatpush1.msra.mxu0 %v87
  %931 = vmatprep.subr.mxu0 %v90
  %932 = vmatpush1.msra.mxu0 %v89
  %933 = vmatprep.subr.mxu0 %v92
  %934 = vmatpush1.msra.mxu0 %v91
  %935 = vmatprep.subr.mxu0 %v94
  %936 = vmatpush1.msra.mxu0 %v93
  %937 = vmatprep.subr.mxu0 %v96
  %938 = vmatpush1.msra.mxu0 %v95
  %939 = vmatprep.mubr.f32.mxu0 %v873
  %940 = vmatmul.mubr.f32.gmra.mrb[0].mxu0 %v871
  %v941 = vpop.f32.mrb[0].mxu0
  %v942 = vadd.f32 0.0, %v941
  %v943 = vpop.f32.mrb[0].mxu0
  %v944 = vadd.f32 0.0, %v943
  %945 = vdwg.mxu0
  %v946 = vmul.f32 %v942, 0.0078125
  %v947 = vmul.f32 %v944, 0.0078125
  %v948 = vadd.f32 %v946, 1e-05
  %v949 = vadd.f32 %v947, 1e-05
  %v950 = vrsqrt.pop %v948
  %v951 = vrsqrt.pop %v949
  %v954 = vcombine.low %v950, %v951
  %v956 = vunpack.c.l.s4 1966171168
  %v957 = vunpack.c.0.s8 %v956
  %v958 = vlaneseq
  %v959 = vshrl.u32 %v958, 7
  %v960 = vsub.s32 %v957, %v959
  %v961 = vrot.slane %v954, %v960
  %v963 = vunpack.c.l.s4 1966171168
  %v964 = vunpack.c.0.s8 %v963
  %v965 = vlaneseq
  %v966 = vshrl.u32 %v965, 7
  %v967 = vsub.s32 %v964, %v966
  %v968 = vrot.slane %v961, %v967
  %v970 = vmul.f32 %v638, %v968
  %v972 = vlaneseq
  %v973 = vshrl.u32 %v972, 7
  %v974 = vsub.s32 0, %v973
  %v975 = vrot.slane %v970, %v974
  %v976 = vlaneseq
  %v977 = vshrl.u32 %v976, 7
  %v978 = vsub.s32 1, %v977
  %v979 = vrot.slane %v970, %v978
  %v982 = vmul.f32 %v796, %v975
  %v983 = vmul.f32 %v797, %v979
  %v984 = vmul.f32 %v798, %v975
  %v985 = vmul.f32 %v799, %v979
  %v987 = vlaneseq
  %v988 = vshrl.u32 %v987, 7
  %v989 = vsub.s32 0, %v988
  %v990 = vrot.slane %v639, %v989
  %v991 = vlaneseq
  %v992 = vshrl.u32 %v991, 7
  %v993 = vsub.s32 1, %v992
  %v994 = vrot.slane %v639, %v993
  %v997 = vadd.f32 %v982, %v990
  %v998 = vadd.f32 %v983, %v994
  %v999 = vadd.f32 %v984, %v990
  %v1000 = vadd.f32 %v985, %v994
  %v1001 = vmax.f32 %v997, 0.0
  %v1002 = vmax.f32 %v998, 0.0
  %v1003 = vmax.f32 %v999, 0.0
  %v1004 = vmax.f32 %v1000, 0.0
  %v1007 = vrot.slane %v1001, 7
  %v1008 = vrot.slane %v1002, 7
  %1011 = vst [vmem:[#allocation2] sm:$0xfe] %v1007
  %1012 = vst [vmem:[#allocation2 + $0x8] sm:$0xfe] %v1008
  %1013 = vst [vmem:[#allocation2 + $0x10] sm:$0x1] %v1007
  %1014 = vst [vmem:[#allocation2 + $0x18] sm:$0x1] %v1008
  %v1017 = vrot.slane %v1003, 5
  %v1018 = vrot.slane %v1004, 5
  %1021 = vst [vmem:[#allocation2 + $0x10] sm:$0xf8] %v1017
  %1022 = vst [vmem:[#allocation2 + $0x18] sm:$0xf8] %v1018
  %1023 = vst [vmem:[#allocation2 + $0x20] sm:$0x7] %v1017
  %1024 = vst [vmem:[#allocation2 + $0x28] sm:$0x7] %v1018
  %v1025 = vld [vmem:[#allocation2] sm:$0xff]
  %v1026 = vld [vmem:[#allocation2 + $0x8] sm:$0xff]
  %v1027 = vld [vmem:[#allocation2 + $0x10] sm:$0xfc]
  %v1028 = vld [vmem:[#allocation2 + $0x18] sm:$0xfc]
  %v1029 = vld [vmem:[#allocation2 + $0x20] sm:$0x3]
  %v1030 = vld [vmem:[#allocation2 + $0x28] sm:$0x3]
  %v1035 = vrot.slane %v1027, 2
  %v1036 = vrot.slane %v1029, 2
  %v1037 = vsel %vm133, %v1035, %v1036
  %v1038 = vrot.slane %v1028, 2
  %v1039 = vrot.slane %v1030, 2
  %v1040 = vsel %vm133, %v1038, %v1039
  %v1043 = vld [vmem:[%s4] sm:$0xff]
  %v1044 = vld [vmem:[%s4 + $0x8] sm:$0xff]
  %v1045 = vld [vmem:[%s4 + $0x10] sm:$0xff]
  %v1046 = vld [vmem:[%s4 + $0x18] sm:$0xff]
  %v1047 = vld [vmem:[%s4 + $0x20] sm:$0xff]
  %v1048 = vld [vmem:[%s4 + $0x28] sm:$0xff]
  %v1049 = vld [vmem:[%s4 + $0x30] sm:$0xff]
  %v1050 = vld [vmem:[%s4 + $0x38] sm:$0xff]
  %v1051 = vld [vmem:[%s4 + $0x40] sm:$0xff]
  %v1052 = vld [vmem:[%s4 + $0x48] sm:$0xff]
  %v1053 = vld [vmem:[%s4 + $0x50] sm:$0xff]
  %v1054 = vld [vmem:[%s4 + $0x58] sm:$0xff]
  %v1055 = vld [vmem:[%s4 + $0x60] sm:$0xff]
  %v1056 = vld [vmem:[%s4 + $0x68] sm:$0xff]
  %v1057 = vld [vmem:[%s4 + $0x70] sm:$0xff]
  %v1058 = vld [vmem:[%s4 + $0x78] sm:$0xff]
  %v1059 = vld [vmem:[%s4 + $0x80] sm:$0xff]
  %v1060 = vld [vmem:[%s4 + $0x88] sm:$0xff]
  %v1061 = vld [vmem:[%s4 + $0x90] sm:$0xff]
  %v1062 = vld [vmem:[%s4 + $0x98] sm:$0xff]
  %v1063 = vld [vmem:[%s4 + $0xa0] sm:$0xff]
  %v1064 = vld [vmem:[%s4 + $0xa8] sm:$0xff]
  %v1065 = vld [vmem:[%s4 + $0xb0] sm:$0xff]
  %v1066 = vld [vmem:[%s4 + $0xb8] sm:$0xff]
  %v1067 = vld [vmem:[%s4 + $0xc0] sm:$0xff]
  %v1068 = vld [vmem:[%s4 + $0xc8] sm:$0xff]
  %v1069 = vld [vmem:[%s4 + $0xd0] sm:$0xff]
  %v1070 = vld [vmem:[%s4 + $0xd8] sm:$0xff]
  %v1071 = vld [vmem:[%s4 + $0xe0] sm:$0xff]
  %v1072 = vld [vmem:[%s4 + $0xe8] sm:$0xff]
  %v1073 = vld [vmem:[%s4 + $0xf0] sm:$0xff]
  %v1074 = vld [vmem:[%s4 + $0xf8] sm:$0xff]
  %v1075 = vld [vmem:[%s4 + $0x100] sm:$0xff]
  %v1076 = vld [vmem:[%s4 + $0x108] sm:$0xff]
  %v1077 = vld [vmem:[%s4 + $0x110] sm:$0xff]
  %v1078 = vld [vmem:[%s4 + $0x118] sm:$0xff]
  %v1079 = vld [vmem:[%s4 + $0x120] sm:$0xff]
  %v1080 = vld [vmem:[%s4 + $0x128] sm:$0xff]
  %v1081 = vld [vmem:[%s4 + $0x130] sm:$0xff]
  %v1082 = vld [vmem:[%s4 + $0x138] sm:$0xff]
  %v1083 = vld [vmem:[%s4 + $0x140] sm:$0xff]
  %v1084 = vld [vmem:[%s4 + $0x148] sm:$0xff]
  %v1085 = vld [vmem:[%s4 + $0x150] sm:$0xff]
  %v1086 = vld [vmem:[%s4 + $0x158] sm:$0xff]
  %v1087 = vld [vmem:[%s4 + $0x160] sm:$0xff]
  %v1088 = vld [vmem:[%s4 + $0x168] sm:$0xff]
  %v1089 = vld [vmem:[%s4 + $0x170] sm:$0xff]
  %v1090 = vld [vmem:[%s4 + $0x178] sm:$0xff]
  %v1091 = vld [vmem:[%s4 + $0x180] sm:$0xff]
  %v1092 = vld [vmem:[%s4 + $0x188] sm:$0xff]
  %v1093 = vld [vmem:[%s4 + $0x190] sm:$0xff]
  %v1094 = vld [vmem:[%s4 + $0x198] sm:$0xff]
  %v1095 = vld [vmem:[%s4 + $0x1a0] sm:$0xff]
  %v1096 = vld [vmem:[%s4 + $0x1a8] sm:$0xff]
  %v1097 = vld [vmem:[%s4 + $0x1b0] sm:$0xff]
  %v1098 = vld [vmem:[%s4 + $0x1b8] sm:$0xff]
  %v1099 = vld [vmem:[%s4 + $0x1c0] sm:$0xff]
  %v1100 = vld [vmem:[%s4 + $0x1c8] sm:$0xff]
  %v1101 = vld [vmem:[%s4 + $0x1d0] sm:$0xff]
  %v1102 = vld [vmem:[%s4 + $0x1d8] sm:$0xff]
  %v1103 = vld [vmem:[%s4 + $0x1e0] sm:$0xff]
  %v1104 = vld [vmem:[%s4 + $0x1e8] sm:$0xff]
  %v1105 = vld [vmem:[%s4 + $0x1f0] sm:$0xff]
  %v1106 = vld [vmem:[%s4 + $0x1f8] sm:$0xff]
  %v1107 = vld [vmem:[#allocation2] sm:$0xfe]
  %v1108 = vld [vmem:[#allocation2 + $0x8] sm:$0xfe]
  %v1109 = vld [vmem:[#allocation2 + $0x10] sm:$0x1]
  %v1110 = vld [vmem:[#allocation2 + $0x18] sm:$0x1]
  %v1111 = vld [vmem:[#allocation2 + $0x10] sm:$0xf8]
  %v1112 = vld [vmem:[#allocation2 + $0x18] sm:$0xf8]
  %v1113 = vld [vmem:[#allocation2 + $0x20] sm:$0x7]
  %v1114 = vld [vmem:[#allocation2 + $0x28] sm:$0x7]
  %v1119 = vrot.slane %v1107, 1
  %v1120 = vrot.slane %v1109, 1
  %v1121 = vsel %vm218, %v1119, %v1120
  %v1122 = vrot.slane %v1108, 1
  %v1123 = vrot.slane %v1110, 1
  %v1124 = vsel %vm218, %v1122, %v1123
  %v1131 = vrot.slane %v1111, 3
  %v1132 = vrot.slane %v1113, 3
  %v1133 = vsel %vm231, %v1131, %v1132
  %v1134 = vrot.slane %v1112, 3
  %v1135 = vrot.slane %v1114, 3
  %v1136 = vsel %vm231, %v1134, %v1135
  %s1139 = scalar_lea.vmem %s4, 512
  %v1140 = vld [vmem:[%s1139] sm:$0xff]
  %v1141 = vld [vmem:[%s1139 + $0x8] sm:$0xff]
  %v1142 = vld [vmem:[%s1139 + $0x10] sm:$0xff]
  %v1143 = vld [vmem:[%s1139 + $0x18] sm:$0xff]
  %v1144 = vld [vmem:[%s1139 + $0x20] sm:$0xff]
  %v1145 = vld [vmem:[%s1139 + $0x28] sm:$0xff]
  %v1146 = vld [vmem:[%s1139 + $0x30] sm:$0xff]
  %v1147 = vld [vmem:[%s1139 + $0x38] sm:$0xff]
  %v1148 = vld [vmem:[%s1139 + $0x40] sm:$0xff]
  %v1149 = vld [vmem:[%s1139 + $0x48] sm:$0xff]
  %v1150 = vld [vmem:[%s1139 + $0x50] sm:$0xff]
  %v1151 = vld [vmem:[%s1139 + $0x58] sm:$0xff]
  %v1152 = vld [vmem:[%s1139 + $0x60] sm:$0xff]
  %v1153 = vld [vmem:[%s1139 + $0x68] sm:$0xff]
  %v1154 = vld [vmem:[%s1139 + $0x70] sm:$0xff]
  %v1155 = vld [vmem:[%s1139 + $0x78] sm:$0xff]
  %v1156 = vld [vmem:[%s1139 + $0x80] sm:$0xff]
  %v1157 = vld [vmem:[%s1139 + $0x88] sm:$0xff]
  %v1158 = vld [vmem:[%s1139 + $0x90] sm:$0xff]
  %v1159 = vld [vmem:[%s1139 + $0x98] sm:$0xff]
  %v1160 = vld [vmem:[%s1139 + $0xa0] sm:$0xff]
  %v1161 = vld [vmem:[%s1139 + $0xa8] sm:$0xff]
  %v1162 = vld [vmem:[%s1139 + $0xb0] sm:$0xff]
  %v1163 = vld [vmem:[%s1139 + $0xb8] sm:$0xff]
  %v1164 = vld [vmem:[%s1139 + $0xc0] sm:$0xff]
  %v1165 = vld [vmem:[%s1139 + $0xc8] sm:$0xff]
  %v1166 = vld [vmem:[%s1139 + $0xd0] sm:$0xff]
  %v1167 = vld [vmem:[%s1139 + $0xd8] sm:$0xff]
  %v1168 = vld [vmem:[%s1139 + $0xe0] sm:$0xff]
  %v1169 = vld [vmem:[%s1139 + $0xe8] sm:$0xff]
  %v1170 = vld [vmem:[%s1139 + $0xf0] sm:$0xff]
  %v1171 = vld [vmem:[%s1139 + $0xf8] sm:$0xff]
  %v1172 = vld [vmem:[%s1139 + $0x100] sm:$0xff]
  %v1173 = vld [vmem:[%s1139 + $0x108] sm:$0xff]
  %v1174 = vld [vmem:[%s1139 + $0x110] sm:$0xff]
  %v1175 = vld [vmem:[%s1139 + $0x118] sm:$0xff]
  %v1176 = vld [vmem:[%s1139 + $0x120] sm:$0xff]
  %v1177 = vld [vmem:[%s1139 + $0x128] sm:$0xff]
  %v1178 = vld [vmem:[%s1139 + $0x130] sm:$0xff]
  %v1179 = vld [vmem:[%s1139 + $0x138] sm:$0xff]
  %v1180 = vld [vmem:[%s1139 + $0x140] sm:$0xff]
  %v1181 = vld [vmem:[%s1139 + $0x148] sm:$0xff]
  %v1182 = vld [vmem:[%s1139 + $0x150] sm:$0xff]
  %v1183 = vld [vmem:[%s1139 + $0x158] sm:$0xff]
  %v1184 = vld [vmem:[%s1139 + $0x160] sm:$0xff]
  %v1185 = vld [vmem:[%s1139 + $0x168] sm:$0xff]
  %v1186 = vld [vmem:[%s1139 + $0x170] sm:$0xff]
  %v1187 = vld [vmem:[%s1139 + $0x178] sm:$0xff]
  %v1188 = vld [vmem:[%s1139 + $0x180] sm:$0xff]
  %v1189 = vld [vmem:[%s1139 + $0x188] sm:$0xff]
  %v1190 = vld [vmem:[%s1139 + $0x190] sm:$0xff]
  %v1191 = vld [vmem:[%s1139 + $0x198] sm:$0xff]
  %v1192 = vld [vmem:[%s1139 + $0x1a0] sm:$0xff]
  %v1193 = vld [vmem:[%s1139 + $0x1a8] sm:$0xff]
  %v1194 = vld [vmem:[%s1139 + $0x1b0] sm:$0xff]
  %v1195 = vld [vmem:[%s1139 + $0x1b8] sm:$0xff]
  %v1196 = vld [vmem:[%s1139 + $0x1c0] sm:$0xff]
  %v1197 = vld [vmem:[%s1139 + $0x1c8] sm:$0xff]
  %v1198 = vld [vmem:[%s1139 + $0x1d0] sm:$0xff]
  %v1199 = vld [vmem:[%s1139 + $0x1d8] sm:$0xff]
  %v1200 = vld [vmem:[%s1139 + $0x1e0] sm:$0xff]
  %v1201 = vld [vmem:[%s1139 + $0x1e8] sm:$0xff]
  %v1202 = vld [vmem:[%s1139 + $0x1f0] sm:$0xff]
  %v1203 = vld [vmem:[%s1139 + $0x1f8] sm:$0xff]
  %1204 = vmatprep.subr.mxu0 %v1141
  %1205 = vmatpush1.msra.mxu0 %v1140
  %1206 = vmatprep.subr.mxu0 %v1143
  %1207 = vmatpush1.msra.mxu0 %v1142
  %1208 = vmatprep.subr.mxu0 %v1145
  %1209 = vmatpush1.msra.mxu0 %v1144
  %1210 = vmatprep.subr.mxu0 %v1147
  %1211 = vmatpush1.msra.mxu0 %v1146
  %1212 = vmatprep.subr.mxu0 %v1149
  %1213 = vmatpush1.msra.mxu0 %v1148
  %1214 = vmatprep.subr.mxu0 %v1151
  %1215 = vmatpush1.msra.mxu0 %v1150
  %1216 = vmatprep.subr.mxu0 %v1153
  %1217 = vmatpush1.msra.mxu0 %v1152
  %1218 = vmatprep.subr.mxu0 %v1155
  %1219 = vmatpush1.msra.mxu0 %v1154
  %1220 = vmatprep.subr.mxu0 %v1157
  %1221 = vmatpush1.msra.mxu0 %v1156
  %1222 = vmatprep.subr.mxu0 %v1159
  %1223 = vmatpush1.msra.mxu0 %v1158
  %1224 = vmatprep.subr.mxu0 %v1161
  %1225 = vmatpush1.msra.mxu0 %v1160
  %1226 = vmatprep.subr.mxu0 %v1163
  %1227 = vmatpush1.msra.mxu0 %v1162
  %1228 = vmatprep.subr.mxu0 %v1165
  %1229 = vmatpush1.msra.mxu0 %v1164
  %1230 = vmatprep.subr.mxu0 %v1167
  %1231 = vmatpush1.msra.mxu0 %v1166
  %1232 = vmatprep.subr.mxu0 %v1169
  %1233 = vmatpush1.msra.mxu0 %v1168
  %1234 = vmatprep.subr.mxu0 %v1171
  %1235 = vmatpush1.msra.mxu0 %v1170
  %1236 = vmatprep.subr.mxu0 %v1173
  %1237 = vmatpush1.msra.mxu0 %v1172
  %1238 = vmatprep.subr.mxu0 %v1175
  %1239 = vmatpush1.msra.mxu0 %v1174
  %1240 = vmatprep.subr.mxu0 %v1177
  %1241 = vmatpush1.msra.mxu0 %v1176
  %1242 = vmatprep.subr.mxu0 %v1179
  %1243 = vmatpush1.msra.mxu0 %v1178
  %1244 = vmatprep.subr.mxu0 %v1181
  %1245 = vmatpush1.msra.mxu0 %v1180
  %1246 = vmatprep.subr.mxu0 %v1183
  %1247 = vmatpush1.msra.mxu0 %v1182
  %1248 = vmatprep.subr.mxu0 %v1185
  %1249 = vmatpush1.msra.mxu0 %v1184
  %1250 = vmatprep.subr.mxu0 %v1187
  %1251 = vmatpush1.msra.mxu0 %v1186
  %1252 = vmatprep.subr.mxu0 %v1189
  %1253 = vmatpush1.msra.mxu0 %v1188
  %1254 = vmatprep.subr.mxu0 %v1191
  %1255 = vmatpush1.msra.mxu0 %v1190
  %1256 = vmatprep.subr.mxu0 %v1193
  %1257 = vmatpush1.msra.mxu0 %v1192
  %1258 = vmatprep.subr.mxu0 %v1195
  %1259 = vmatpush1.msra.mxu0 %v1194
  %1260 = vmatprep.subr.mxu0 %v1197
  %1261 = vmatpush1.msra.mxu0 %v1196
  %1262 = vmatprep.subr.mxu0 %v1199
  %1263 = vmatpush1.msra.mxu0 %v1198
  %1264 = vmatprep.subr.mxu0 %v1201
  %1265 = vmatpush1.msra.mxu0 %v1200
  %1266 = vmatprep.subr.mxu0 %v1203
  %1267 = vmatpush1.msra.mxu0 %v1202
  %1268 = vmatprep.mubr.f32.mxu0 %v1124
  %1269 = vmatmul.mubr.f32.gmra.mrb[0].mxu0 %v1121
  %v1270 = vpop.f32.mrb[0].mxu0
  %v1271 = vadd.f32 0.0, %v1270
  %v1272 = vpop.f32.mrb[0].mxu0
  %v1273 = vadd.f32 0.0, %v1272
  %1274 = vmatprep.mubr.f32.mxu0 %v1136
  %1275 = vmatmul.mubr.f32.gmra.mrb[0].mxu0 %v1133
  %v1276 = vpop.f32.mrb[0].mxu0
  %v1277 = vadd.f32 0.0, %v1276
  %v1278 = vpop.f32.mrb[0].mxu0
  %v1279 = vadd.f32 0.0, %v1278
  %1280 = vdwg.mxu0
  %1281 = vmatprep.subr.mxu0 %v1044
  %1282 = vmatpush1.msra.mxu0 %v1043
  %1283 = vmatprep.subr.mxu0 %v1046
  %1284 = vmatpush1.msra.mxu0 %v1045
  %1285 = vmatprep.subr.mxu0 %v1048
  %1286 = vmatpush1.msra.mxu0 %v1047
  %1287 = vmatprep.subr.mxu0 %v1050
  %1288 = vmatpush1.msra.mxu0 %v1049
  %1289 = vmatprep.subr.mxu0 %v1052
  %1290 = vmatpush1.msra.mxu0 %v1051
  %1291 = vmatprep.subr.mxu0 %v1054
  %1292 = vmatpush1.msra.mxu0 %v1053
  %1293 = vmatprep.subr.mxu0 %v1056
  %1294 = vmatpush1.msra.mxu0 %v1055
  %1295 = vmatprep.subr.mxu0 %v1058
  %1296 = vmatpush1.msra.mxu0 %v1057
  %1297 = vmatprep.subr.mxu0 %v1060
  %1298 = vmatpush1.msra.mxu0 %v1059
  %1299 = vmatprep.subr.mxu0 %v1062
  %1300 = vmatpush1.msra.mxu0 %v1061
  %1301 = vmatprep.subr.mxu0 %v1064
  %1302 = vmatpush1.msra.mxu0 %v1063
  %1303 = vmatprep.subr.mxu0 %v1066
  %1304 = vmatpush1.msra.mxu0 %v1065
  %1305 = vmatprep.subr.mxu0 %v1068
  %1306 = vmatpush1.msra.mxu0 %v1067
  %1307 = vmatprep.subr.mxu0 %v1070
  %1308 = vmatpush1.msra.mxu0 %v1069
  %1309 = vmatprep.subr.mxu0 %v1072
  %1310 = vmatpush1.msra.mxu0 %v1071
  %1311 = vmatprep.subr.mxu0 %v1074
  %1312 = vmatpush1.msra.mxu0 %v1073
  %1313 = vmatprep.subr.mxu0 %v1076
  %1314 = vmatpush1.msra.mxu0 %v1075
  %1315 = vmatprep.subr.mxu0 %v1078
  %1316 = vmatpush1.msra.mxu0 %v1077
  %1317 = vmatprep.subr.mxu0 %v1080
  %1318 = vmatpush1.msra.mxu0 %v1079
  %1319 = vmatprep.subr.mxu0 %v1082
  %1320 = vmatpush1.msra.mxu0 %v1081
  %1321 = vmatprep.subr.mxu0 %v1084
  %1322 = vmatpush1.msra.mxu0 %v1083
  %1323 = vmatprep.subr.mxu0 %v1086
  %1324 = vmatpush1.msra.mxu0 %v1085
  %1325 = vmatprep.subr.mxu0 %v1088
  %1326 = vmatpush1.msra.mxu0 %v1087
  %1327 = vmatprep.subr.mxu0 %v1090
  %1328 = vmatpush1.msra.mxu0 %v1089
  %1329 = vmatprep.subr.mxu0 %v1092
  %1330 = vmatpush1.msra.mxu0 %v1091
  %1331 = vmatprep.subr.mxu0 %v1094
  %1332 = vmatpush1.msra.mxu0 %v1093
  %1333 = vmatprep.subr.mxu0 %v1096
  %1334 = vmatpush1.msra.mxu0 %v1095
  %1335 = vmatprep.subr.mxu0 %v1098
  %1336 = vmatpush1.msra.mxu0 %v1097
  %1337 = vmatprep.subr.mxu0 %v1100
  %1338 = vmatpush1.msra.mxu0 %v1099
  %1339 = vmatprep.subr.mxu0 %v1102
  %1340 = vmatpush1.msra.mxu0 %v1101
  %1341 = vmatprep.subr.mxu0 %v1104
  %1342 = vmatpush1.msra.mxu0 %v1103
  %1343 = vmatprep.subr.mxu0 %v1106
  %1344 = vmatpush1.msra.mxu0 %v1105
  %1345 = vmatprep.mubr.f32.mxu0 %v1026
  %1346 = vmatmul.mubr.f32.gmra.mrb[0].mxu0 %v1025
  %v1347 = vpop.f32.mrb[0].mxu0
  %v1348 = vadd.f32 %v1271, %v1347
  %v1349 = vpop.f32.mrb[0].mxu0
  %v1350 = vadd.f32 %v1273, %v1349
  %1351 = vmatprep.mubr.f32.mxu0 %v1040
  %1352 = vmatmul.mubr.f32.gmra.mrb[0].mxu0 %v1037
  %v1353 = vpop.f32.mrb[0].mxu0
  %v1354 = vadd.f32 %v1277, %v1353
  %v1355 = vpop.f32.mrb[0].mxu0
  %v1356 = vadd.f32 %v1279, %v1355
  %1357 = vdwg.mxu0
  %v1358 = vld [vmem:[#allocation2] sm:$0xfc]
  %v1359 = vld [vmem:[#allocation2 + $0x8] sm:$0xfc]
  %v1360 = vld [vmem:[#allocation2 + $0x10] sm:$0x3]
  %v1361 = vld [vmem:[#allocation2 + $0x18] sm:$0x3]
  %v1362 = vld [vmem:[#allocation2 + $0x10] sm:$0xf0]
  %v1363 = vld [vmem:[#allocation2 + $0x18] sm:$0xf0]
  %v1364 = vld [vmem:[#allocation2 + $0x20] sm:$0xf]
  %v1365 = vld [vmem:[#allocation2 + $0x28] sm:$0xf]
  %v1370 = vrot.slane %v1358, 2
  %v1371 = vrot.slane %v1360, 2
  %v1372 = vsel %vm133, %v1370, %v1371
  %v1373 = vrot.slane %v1359, 2
  %v1374 = vrot.slane %v1361, 2
  %v1375 = vsel %vm133, %v1373, %v1374
  %v1382 = vrot.slane %v1362, 4
  %v1383 = vrot.slane %v1364, 4
  %v1384 = vsel %vm483, %v1382, %v1383
  %v1385 = vrot.slane %v1363, 4
  %v1386 = vrot.slane %v1365, 4
  %v1387 = vsel %vm483, %v1385, %v1386
  %s1390 = scalar_lea.vmem %s4, 1024
  %v1391 = vld [vmem:[%s1390] sm:$0xff]
  %v1392 = vld [vmem:[%s1390 + $0x8] sm:$0xff]
  %v1393 = vld [vmem:[%s1390 + $0x10] sm:$0xff]
  %v1394 = vld [vmem:[%s1390 + $0x18] sm:$0xff]
  %v1395 = vld [vmem:[%s1390 + $0x20] sm:$0xff]
  %v1396 = vld [vmem:[%s1390 + $0x28] sm:$0xff]
  %v1397 = vld [vmem:[%s1390 + $0x30] sm:$0xff]
  %v1398 = vld [vmem:[%s1390 + $0x38] sm:$0xff]
  %v1399 = vld [vmem:[%s1390 + $0x40] sm:$0xff]
  %v1400 = vld [vmem:[%s1390 + $0x48] sm:$0xff]
  %v1401 = vld [vmem:[%s1390 + $0x50] sm:$0xff]
  %v1402 = vld [vmem:[%s1390 + $0x58] sm:$0xff]
  %v1403 = vld [vmem:[%s1390 + $0x60] sm:$0xff]
  %v1404 = vld [vmem:[%s1390 + $0x68] sm:$0xff]
  %v1405 = vld [vmem:[%s1390 + $0x70] sm:$0xff]
  %v1406 = vld [vmem:[%s1390 + $0x78] sm:$0xff]
  %v1407 = vld [vmem:[%s1390 + $0x80] sm:$0xff]
  %v1408 = vld [vmem:[%s1390 + $0x88] sm:$0xff]
  %v1409 = vld [vmem:[%s1390 + $0x90] sm:$0xff]
  %v1410 = vld [vmem:[%s1390 + $0x98] sm:$0xff]
  %v1411 = vld [vmem:[%s1390 + $0xa0] sm:$0xff]
  %v1412 = vld [vmem:[%s1390 + $0xa8] sm:$0xff]
  %v1413 = vld [vmem:[%s1390 + $0xb0] sm:$0xff]
  %v1414 = vld [vmem:[%s1390 + $0xb8] sm:$0xff]
  %v1415 = vld [vmem:[%s1390 + $0xc0] sm:$0xff]
  %v1416 = vld [vmem:[%s1390 + $0xc8] sm:$0xff]
  %v1417 = vld [vmem:[%s1390 + $0xd0] sm:$0xff]
  %v1418 = vld [vmem:[%s1390 + $0xd8] sm:$0xff]
  %v1419 = vld [vmem:[%s1390 + $0xe0] sm:$0xff]
  %v1420 = vld [vmem:[%s1390 + $0xe8] sm:$0xff]
  %v1421 = vld [vmem:[%s1390 + $0xf0] sm:$0xff]
  %v1422 = vld [vmem:[%s1390 + $0xf8] sm:$0xff]
  %v1423 = vld [vmem:[%s1390 + $0x100] sm:$0xff]
  %v1424 = vld [vmem:[%s1390 + $0x108] sm:$0xff]
  %v1425 = vld [vmem:[%s1390 + $0x110] sm:$0xff]
  %v1426 = vld [vmem:[%s1390 + $0x118] sm:$0xff]
  %v1427 = vld [vmem:[%s1390 + $0x120] sm:$0xff]
  %v1428 = vld [vmem:[%s1390 + $0x128] sm:$0xff]
  %v1429 = vld [vmem:[%s1390 + $0x130] sm:$0xff]
  %v1430 = vld [vmem:[%s1390 + $0x138] sm:$0xff]
  %v1431 = vld [vmem:[%s1390 + $0x140] sm:$0xff]
  %v1432 = vld [vmem:[%s1390 + $0x148] sm:$0xff]
  %v1433 = vld [vmem:[%s1390 + $0x150] sm:$0xff]
  %v1434 = vld [vmem:[%s1390 + $0x158] sm:$0xff]
  %v1435 = vld [vmem:[%s1390 + $0x160] sm:$0xff]
  %v1436 = vld [vmem:[%s1390 + $0x168] sm:$0xff]
  %v1437 = vld [vmem:[%s1390 + $0x170] sm:$0xff]
  %v1438 = vld [vmem:[%s1390 + $0x178] sm:$0xff]
  %v1439 = vld [vmem:[%s1390 + $0x180] sm:$0xff]
  %v1440 = vld [vmem:[%s1390 + $0x188] sm:$0xff]
  %v1441 = vld [vmem:[%s1390 + $0x190] sm:$0xff]
  %v1442 = vld [vmem:[%s1390 + $0x198] sm:$0xff]
  %v1443 = vld [vmem:[%s1390 + $0x1a0] sm:$0xff]
  %v1444 = vld [vmem:[%s1390 + $0x1a8] sm:$0xff]
  %v1445 = vld [vmem:[%s1390 + $0x1b0] sm:$0xff]
  %v1446 = vld [vmem:[%s1390 + $0x1b8] sm:$0xff]
  %v1447 = vld [vmem:[%s1390 + $0x1c0] sm:$0xff]
  %v1448 = vld [vmem:[%s1390 + $0x1c8] sm:$0xff]
  %v1449 = vld [vmem:[%s1390 + $0x1d0] sm:$0xff]
  %v1450 = vld [vmem:[%s1390 + $0x1d8] sm:$0xff]
  %v1451 = vld [vmem:[%s1390 + $0x1e0] sm:$0xff]
  %v1452 = vld [vmem:[%s1390 + $0x1e8] sm:$0xff]
  %v1453 = vld [vmem:[%s1390 + $0x1f0] sm:$0xff]
  %v1454 = vld [vmem:[%s1390 + $0x1f8] sm:$0xff]
  %1455 = vmatprep.subr.mxu0 %v1392
  %1456 = vmatpush1.msra.mxu0 %v1391
  %1457 = vmatprep.subr.mxu0 %v1394
  %1458 = vmatpush1.msra.mxu0 %v1393
  %1459 = vmatprep.subr.mxu0 %v1396
  %1460 = vmatpush1.msra.mxu0 %v1395
  %1461 = vmatprep.subr.mxu0 %v1398
  %1462 = vmatpush1.msra.mxu0 %v1397
  %1463 = vmatprep.subr.mxu0 %v1400
  %1464 = vmatpush1.msra.mxu0 %v1399
  %1465 = vmatprep.subr.mxu0 %v1402
  %1466 = vmatpush1.msra.mxu0 %v1401
  %1467 = vmatprep.subr.mxu0 %v1404
  %1468 = vmatpush1.msra.mxu0 %v1403
  %1469 = vmatprep.subr.mxu0 %v1406
  %1470 = vmatpush1.msra.mxu0 %v1405
  %1471 = vmatprep.subr.mxu0 %v1408
  %1472 = vmatpush1.msra.mxu0 %v1407
  %1473 = vmatprep.subr.mxu0 %v1410
  %1474 = vmatpush1.msra.mxu0 %v1409
  %1475 = vmatprep.subr.mxu0 %v1412
  %1476 = vmatpush1.msra.mxu0 %v1411
  %1477 = vmatprep.subr.mxu0 %v1414
  %1478 = vmatpush1.msra.mxu0 %v1413
  %1479 = vmatprep.subr.mxu0 %v1416
  %1480 = vmatpush1.msra.mxu0 %v1415
  %1481 = vmatprep.subr.mxu0 %v1418
  %1482 = vmatpush1.msra.mxu0 %v1417
  %1483 = vmatprep.subr.mxu0 %v1420
  %1484 = vmatpush1.msra.mxu0 %v1419
  %1485 = vmatprep.subr.mxu0 %v1422
  %1486 = vmatpush1.msra.mxu0 %v1421
  %1487 = vmatprep.subr.mxu0 %v1424
  %1488 = vmatpush1.msra.mxu0 %v1423
  %1489 = vmatprep.subr.mxu0 %v1426
  %1490 = vmatpush1.msra.mxu0 %v1425
  %1491 = vmatprep.subr.mxu0 %v1428
  %1492 = vmatpush1.msra.mxu0 %v1427
  %1493 = vmatprep.subr.mxu0 %v1430
  %1494 = vmatpush1.msra.mxu0 %v1429
  %1495 = vmatprep.subr.mxu0 %v1432
  %1496 = vmatpush1.msra.mxu0 %v1431
  %1497 = vmatprep.subr.mxu0 %v1434
  %1498 = vmatpush1.msra.mxu0 %v1433
  %1499 = vmatprep.subr.mxu0 %v1436
  %1500 = vmatpush1.msra.mxu0 %v1435
  %1501 = vmatprep.subr.mxu0 %v1438
  %1502 = vmatpush1.msra.mxu0 %v1437
  %1503 = vmatprep.subr.mxu0 %v1440
  %1504 = vmatpush1.msra.mxu0 %v1439
  %1505 = vmatprep.subr.mxu0 %v1442
  %1506 = vmatpush1.msra.mxu0 %v1441
  %1507 = vmatprep.subr.mxu0 %v1444
  %1508 = vmatpush1.msra.mxu0 %v1443
  %1509 = vmatprep.subr.mxu0 %v1446
  %1510 = vmatpush1.msra.mxu0 %v1445
  %1511 = vmatprep.subr.mxu0 %v1448
  %1512 = vmatpush1.msra.mxu0 %v1447
  %1513 = vmatprep.subr.mxu0 %v1450
  %1514 = vmatpush1.msra.mxu0 %v1449
  %1515 = vmatprep.subr.mxu0 %v1452
  %1516 = vmatpush1.msra.mxu0 %v1451
  %1517 = vmatprep.subr.mxu0 %v1454
  %1518 = vmatpush1.msra.mxu0 %v1453
  %1519 = vmatprep.mubr.f32.mxu0 %v1375
  %1520 = vmatmul.mubr.f32.gmra.mrb[0].mxu0 %v1372
  %v1521 = vpop.f32.mrb[0].mxu0
  %v1522 = vadd.f32 0.0, %v1521
  %v1523 = vpop.f32.mrb[0].mxu0
  %v1524 = vadd.f32 0.0, %v1523
  %1525 = vmatprep.mubr.f32.mxu0 %v1387
  %1526 = vmatmul.mubr.f32.gmra.mrb[0].mxu0 %v1384
  %v1527 = vpop.f32.mrb[0].mxu0
  %v1528 = vadd.f32 0.0, %v1527
  %v1529 = vpop.f32.mrb[0].mxu0
  %v1530 = vadd.f32 0.0, %v1529
  %1531 = vdwg.mxu0
  %v1532 = vadd.f32 %v1348, %v1522
  %v1533 = vadd.f32 %v1350, %v1524
  %v1534 = vadd.f32 %v1354, %v1528
  %v1535 = vadd.f32 %v1356, %v1530
  %v1536 = vld [vmem:[%s5] sm:$0x3]
  %v1537 = vld [vmem:[%s6] sm:$0x3]
  %1538 = vmatprep.subr.mxu0 %v1533
  %1539 = vmatpush1.msra.mxu0 %v1532
  %1540 = vmatprep.subr.mxu0 %v1535
  %1541 = vmatpush1.msra.mxu0 %v1534
  %1542 = vmatprep.subr.mxu0 0.0
  %1543 = vmatpush1.msra.mxu0 0.0
  %1544 = vmatprep.subr.mxu0 0.0
  %1545 = vmatpush1.msra.mxu0 0.0
  %1546 = vmatprep.subr.mxu0 0.0
  %1547 = vmatpush1.msra.mxu0 0.0
  %1548 = vmatprep.subr.mxu0 0.0
  %1549 = vmatpush1.msra.mxu0 0.0
  %1550 = vmatprep.subr.mxu0 0.0
  %1551 = vmatpush1.msra.mxu0 0.0
  %1552 = vmatprep.subr.mxu0 0.0
  %1553 = vmatpush1.msra.mxu0 0.0
  %1554 = vmatprep.subr.mxu0 0.0
  %1555 = vmatpush1.msra.mxu0 0.0
  %1556 = vmatprep.subr.mxu0 0.0
  %1557 = vmatpush1.msra.mxu0 0.0
  %1558 = vmatprep.subr.mxu0 0.0
  %1559 = vmatpush1.msra.mxu0 0.0
  %1560 = vmatprep.subr.mxu0 0.0
  %1561 = vmatpush1.msra.mxu0 0.0
  %1562 = vmatprep.subr.mxu0 0.0
  %1563 = vmatpush1.msra.mxu0 0.0
  %1564 = vmatprep.subr.mxu0 0.0
  %1565 = vmatpush1.msra.mxu0 0.0
  %1566 = vmatprep.subr.mxu0 0.0
  %1567 = vmatpush1.msra.mxu0 0.0
  %1568 = vmatprep.subr.mxu0 0.0
  %1569 = vmatpush1.msra.mxu0 0.0
  %1570 = vmatprep.subr.mxu0 0.0
  %1571 = vmatpush1.msra.mxu0 0.0
  %1572 = vmatprep.subr.mxu0 0.0
  %1573 = vmatpush1.msra.mxu0 0.0
  %1574 = vmatprep.subr.mxu0 0.0
  %1575 = vmatpush1.msra.mxu0 0.0
  %1576 = vmatprep.subr.mxu0 0.0
  %1577 = vmatpush1.msra.mxu0 0.0
  %1578 = vmatprep.subr.mxu0 0.0
  %1579 = vmatpush1.msra.mxu0 0.0
  %1580 = vmatprep.subr.mxu0 0.0
  %1581 = vmatpush1.msra.mxu0 0.0
  %1582 = vmatprep.subr.mxu0 0.0
  %1583 = vmatpush1.msra.mxu0 0.0
  %1584 = vmatprep.subr.mxu0 0.0
  %1585 = vmatpush1.msra.mxu0 0.0
  %1586 = vmatprep.subr.mxu0 0.0
  %1587 = vmatpush1.msra.mxu0 0.0
  %1588 = vmatprep.subr.mxu0 0.0
  %1589 = vmatpush1.msra.mxu0 0.0
  %1590 = vmatprep.subr.mxu0 0.0
  %1591 = vmatpush1.msra.mxu0 0.0
  %1592 = vmatprep.subr.mxu0 0.0
  %1593 = vmatpush1.msra.mxu0 0.0
  %1594 = vmatprep.subr.mxu0 0.0
  %1595 = vmatpush1.msra.mxu0 0.0
  %1596 = vmatprep.subr.mxu0 0.0
  %1597 = vmatpush1.msra.mxu0 0.0
  %1598 = vmatprep.subr.mxu0 0.0
  %1599 = vmatpush1.msra.mxu0 0.0
  %1600 = vmatprep.subr.mxu0 0.0
  %1601 = vmatpush1.msra.mxu0 0.0
  %1602 = vmatprep.mubr.f32.mxu0 0.0
  %1603 = vmatmul.mubr.f32.gmra.mrb[0].mxu0 %v642
  %v1604 = vpop.f32.mrb[0].mxu0
  %v1605 = vadd.f32 0.0, %v1604
  %v1606 = vpop.f32.mrb[0].mxu0
  %v1607 = vadd.f32 0.0, %v1606
  %1608 = vdwg.mxu0
  %1609 = vmatprep.subr.mxu0 %v34
  %1610 = vmatpush1.msra.mxu0 %v33
  %1611 = vmatprep.subr.mxu0 %v36
  %1612 = vmatpush1.msra.mxu0 %v35
  %1613 = vmatprep.subr.mxu0 %v38
  %1614 = vmatpush1.msra.mxu0 %v37
  %1615 = vmatprep.subr.mxu0 %v40
  %1616 = vmatpush1.msra.mxu0 %v39
  %1617 = vmatprep.subr.mxu0 %v42
  %1618 = vmatpush1.msra.mxu0 %v41
  %1619 = vmatprep.subr.mxu0 %v44
  %1620 = vmatpush1.msra.mxu0 %v43
  %1621 = vmatprep.subr.mxu0 %v46
  %1622 = vmatpush1.msra.mxu0 %v45
  %1623 = vmatprep.subr.mxu0 %v48
  %1624 = vmatpush1.msra.mxu0 %v47
  %1625 = vmatprep.subr.mxu0 %v50
  %1626 = vmatpush1.msra.mxu0 %v49
  %1627 = vmatprep.subr.mxu0 %v52
  %1628 = vmatpush1.msra.mxu0 %v51
  %1629 = vmatprep.subr.mxu0 %v54
  %1630 = vmatpush1.msra.mxu0 %v53
  %1631 = vmatprep.subr.mxu0 %v56
  %1632 = vmatpush1.msra.mxu0 %v55
  %1633 = vmatprep.subr.mxu0 %v58
  %1634 = vmatpush1.msra.mxu0 %v57
  %1635 = vmatprep.subr.mxu0 %v60
  %1636 = vmatpush1.msra.mxu0 %v59
  %1637 = vmatprep.subr.mxu0 %v62
  %1638 = vmatpush1.msra.mxu0 %v61
  %1639 = vmatprep.subr.mxu0 %v64
  %1640 = vmatpush1.msra.mxu0 %v63
  %1641 = vmatprep.subr.mxu0 %v66
  %1642 = vmatpush1.msra.mxu0 %v65
  %1643 = vmatprep.subr.mxu0 %v68
  %1644 = vmatpush1.msra.mxu0 %v67
  %1645 = vmatprep.subr.mxu0 %v70
  %1646 = vmatpush1.msra.mxu0 %v69
  %1647 = vmatprep.subr.mxu0 %v72
  %1648 = vmatpush1.msra.mxu0 %v71
  %1649 = vmatprep.subr.mxu0 %v74
  %1650 = vmatpush1.msra.mxu0 %v73
  %1651 = vmatprep.subr.mxu0 %v76
  %1652 = vmatpush1.msra.mxu0 %v75
  %1653 = vmatprep.subr.mxu0 %v78
  %1654 = vmatpush1.msra.mxu0 %v77
  %1655 = vmatprep.subr.mxu0 %v80
  %1656 = vmatpush1.msra.mxu0 %v79
  %1657 = vmatprep.subr.mxu0 %v82
  %1658 = vmatpush1.msra.mxu0 %v81
  %1659 = vmatprep.subr.mxu0 %v84
  %1660 = vmatpush1.msra.mxu0 %v83
  %1661 = vmatprep.subr.mxu0 %v86
  %1662 = vmatpush1.msra.mxu0 %v85
  %1663 = vmatprep.subr.mxu0 %v88
  %1664 = vmatpush1.msra.mxu0 %v87
  %1665 = vmatprep.subr.mxu0 %v90
  %1666 = vmatpush1.msra.mxu0 %v89
  %1667 = vmatprep.subr.mxu0 %v92
  %1668 = vmatpush1.msra.mxu0 %v91
  %1669 = vmatprep.subr.mxu0 %v94
  %1670 = vmatpush1.msra.mxu0 %v93
  %1671 = vmatprep.subr.mxu0 %v96
  %1672 = vmatpush1.msra.mxu0 %v95
  %1673 = vmatprep.mubr.f32.mxu0 %v1607
  %1674 = vmatmul.mubr.f32.gmra.mrb[0].mxu0 %v1605
  %v1675 = vpop.f32.mrb[0].mxu0
  %v1676 = vadd.f32 0.0, %v1675
  %v1677 = vpop.f32.mrb[0].mxu0
  %v1678 = vadd.f32 0.0, %v1677
  %1679 = vdwg.mxu0
  %v1680 = vmul.f32 %v1676, 0.0078125
  %v1681 = vmul.f32 %v1678, 0.0078125
  %v1682 = vlaneseq
  %v1683 = vshrl.u32 %v1682, 7
  %v1684 = vsub.s32 0, %v1683
  %v1685 = vrot.slane %v1680, %v1684
  %v1686 = vlaneseq
  %v1687 = vshrl.u32 %v1686, 7
  %v1688 = vsub.s32 0, %v1687
  %v1689 = vrot.slane %v1681, %v1688
  %v1690 = vsub.f32 %v1532, %v1685
  %v1691 = vsub.f32 %v1533, %v1689
  %v1692 = vsub.f32 %v1534, %v1685
  %v1693 = vsub.f32 %v1535, %v1689
  %v1694 = vmul.f32 %v1690, %v1690
  %v1695 = vmul.f32 %v1691, %v1691
  %v1696 = vmul.f32 %v1692, %v1692
  %v1697 = vmul.f32 %v1693, %v1693
  %1698 = vmatprep.subr.mxu0 %v1695
  %1699 = vmatpush1.msra.mxu0 %v1694
  %1700 = vmatprep.subr.mxu0 %v1697
  %1701 = vmatpush1.msra.mxu0 %v1696
  %1702 = vmatprep.subr.mxu0 0.0
  %1703 = vmatpush1.msra.mxu0 0.0
  %1704 = vmatprep.subr.mxu0 0.0
  %1705 = vmatpush1.msra.mxu0 0.0
  %1706 = vmatprep.subr.mxu0 0.0
  %1707 = vmatpush1.msra.mxu0 0.0
  %1708 = vmatprep.subr.mxu0 0.0
  %1709 = vmatpush1.msra.mxu0 0.0
  %1710 = vmatprep.subr.mxu0 0.0
  %1711 = vmatpush1.msra.mxu0 0.0
  %1712 = vmatprep.subr.mxu0 0.0
  %1713 = vmatpush1.msra.mxu0 0.0
  %1714 = vmatprep.subr.mxu0 0.0
  %1715 = vmatpush1.msra.mxu0 0.0
  %1716 = vmatprep.subr.mxu0 0.0
  %1717 = vmatpush1.msra.mxu0 0.0
  %1718 = vmatprep.subr.mxu0 0.0
  %1719 = vmatpush1.msra.mxu0 0.0
  %1720 = vmatprep.subr.mxu0 0.0
  %1721 = vmatpush1.msra.mxu0 0.0
  %1722 = vmatprep.subr.mxu0 0.0
  %1723 = vmatpush1.msra.mxu0 0.0
  %1724 = vmatprep.subr.mxu0 0.0
  %1725 = vmatpush1.msra.mxu0 0.0
  %1726 = vmatprep.subr.mxu0 0.0
  %1727 = vmatpush1.msra.mxu0 0.0
  %1728 = vmatprep.subr.mxu0 0.0
  %1729 = vmatpush1.msra.mxu0 0.0
  %1730 = vmatprep.subr.mxu0 0.0
  %1731 = vmatpush1.msra.mxu0 0.0
  %1732 = vmatprep.subr.mxu0 0.0
  %1733 = vmatpush1.msra.mxu0 0.0
  %1734 = vmatprep.subr.mxu0 0.0
  %1735 = vmatpush1.msra.mxu0 0.0
  %1736 = vmatprep.subr.mxu0 0.0
  %1737 = vmatpush1.msra.mxu0 0.0
  %1738 = vmatprep.subr.mxu0 0.0
  %1739 = vmatpush1.msra.mxu0 0.0
  %1740 = vmatprep.subr.mxu0 0.0
  %1741 = vmatpush1.msra.mxu0 0.0
  %1742 = vmatprep.subr.mxu0 0.0
  %1743 = vmatpush1.msra.mxu0 0.0
  %1744 = vmatprep.subr.mxu0 0.0
  %1745 = vmatpush1.msra.mxu0 0.0
  %1746 = vmatprep.subr.mxu0 0.0
  %1747 = vmatpush1.msra.mxu0 0.0
  %1748 = vmatprep.subr.mxu0 0.0
  %1749 = vmatpush1.msra.mxu0 0.0
  %1750 = vmatprep.subr.mxu0 0.0
  %1751 = vmatpush1.msra.mxu0 0.0
  %1752 = vmatprep.subr.mxu0 0.0
  %1753 = vmatpush1.msra.mxu0 0.0
  %1754 = vmatprep.subr.mxu0 0.0
  %1755 = vmatpush1.msra.mxu0 0.0
  %1756 = vmatprep.subr.mxu0 0.0
  %1757 = vmatpush1.msra.mxu0 0.0
  %1758 = vmatprep.subr.mxu0 0.0
  %1759 = vmatpush1.msra.mxu0 0.0
  %1760 = vmatprep.subr.mxu0 0.0
  %1761 = vmatpush1.msra.mxu0 0.0
  %1762 = vmatprep.mubr.f32.mxu0 0.0
  %1763 = vmatmul.mubr.f32.gmra.mrb[0].mxu0 %v642
  %v1764 = vpop.f32.mrb[0].mxu0
  %v1765 = vadd.f32 0.0, %v1764
  %v1766 = vpop.f32.mrb[0].mxu0
  %v1767 = vadd.f32 0.0, %v1766
  %1768 = vdwg.mxu0
  %1769 = vmatprep.subr.mxu0 %v34
  %1770 = vmatpush1.msra.mxu0 %v33
  %1771 = vmatprep.subr.mxu0 %v36
  %1772 = vmatpush1.msra.mxu0 %v35
  %1773 = vmatprep.subr.mxu0 %v38
  %1774 = vmatpush1.msra.mxu0 %v37
  %1775 = vmatprep.subr.mxu0 %v40
  %1776 = vmatpush1.msra.mxu0 %v39
  %1777 = vmatprep.subr.mxu0 %v42
  %1778 = vmatpush1.msra.mxu0 %v41
  %1779 = vmatprep.subr.mxu0 %v44
  %1780 = vmatpush1.msra.mxu0 %v43
  %1781 = vmatprep.subr.mxu0 %v46
  %1782 = vmatpush1.msra.mxu0 %v45
  %1783 = vmatprep.subr.mxu0 %v48
  %1784 = vmatpush1.msra.mxu0 %v47
  %1785 = vmatprep.subr.mxu0 %v50
  %1786 = vmatpush1.msra.mxu0 %v49
  %1787 = vmatprep.subr.mxu0 %v52
  %1788 = vmatpush1.msra.mxu0 %v51
  %1789 = vmatprep.subr.mxu0 %v54
  %1790 = vmatpush1.msra.mxu0 %v53
  %1791 = vmatprep.subr.mxu0 %v56
  %1792 = vmatpush1.msra.mxu0 %v55
  %1793 = vmatprep.subr.mxu0 %v58
  %1794 = vmatpush1.msra.mxu0 %v57
  %1795 = vmatprep.subr.mxu0 %v60
  %1796 = vmatpush1.msra.mxu0 %v59
  %1797 = vmatprep.subr.mxu0 %v62
  %1798 = vmatpush1.msra.mxu0 %v61
  %1799 = vmatprep.subr.mxu0 %v64
  %1800 = vmatpush1.msra.mxu0 %v63
  %1801 = vmatprep.subr.mxu0 %v66
  %1802 = vmatpush1.msra.mxu0 %v65
  %1803 = vmatprep.subr.mxu0 %v68
  %1804 = vmatpush1.msra.mxu0 %v67
  %1805 = vmatprep.subr.mxu0 %v70
  %1806 = vmatpush1.msra.mxu0 %v69
  %1807 = vmatprep.subr.mxu0 %v72
  %1808 = vmatpush1.msra.mxu0 %v71
  %1809 = vmatprep.subr.mxu0 %v74
  %1810 = vmatpush1.msra.mxu0 %v73
  %1811 = vmatprep.subr.mxu0 %v76
  %1812 = vmatpush1.msra.mxu0 %v75
  %1813 = vmatprep.subr.mxu0 %v78
  %1814 = vmatpush1.msra.mxu0 %v77
  %1815 = vmatprep.subr.mxu0 %v80
  %1816 = vmatpush1.msra.mxu0 %v79
  %1817 = vmatprep.subr.mxu0 %v82
  %1818 = vmatpush1.msra.mxu0 %v81
  %1819 = vmatprep.subr.mxu0 %v84
  %1820 = vmatpush1.msra.mxu0 %v83
  %1821 = vmatprep.subr.mxu0 %v86
  %1822 = vmatpush1.msra.mxu0 %v85
  %1823 = vmatprep.subr.mxu0 %v88
  %1824 = vmatpush1.msra.mxu0 %v87
  %1825 = vmatprep.subr.mxu0 %v90
  %1826 = vmatpush1.msra.mxu0 %v89
  %1827 = vmatprep.subr.mxu0 %v92
  %1828 = vmatpush1.msra.mxu0 %v91
  %1829 = vmatprep.subr.mxu0 %v94
  %1830 = vmatpush1.msra.mxu0 %v93
  %1831 = vmatprep.subr.mxu0 %v96
  %1832 = vmatpush1.msra.mxu0 %v95
  %1833 = vmatprep.mubr.f32.mxu0 %v1767
  %1834 = vmatmul.mubr.f32.gmra.mrb[0].mxu0 %v1765
  %v1835 = vpop.f32.mrb[0].mxu0
  %v1836 = vadd.f32 0.0, %v1835
  %v1837 = vpop.f32.mrb[0].mxu0
  %v1838 = vadd.f32 0.0, %v1837
  %1839 = vdwg.mxu0
  %v1840 = vmul.f32 %v1836, 0.0078125
  %v1841 = vmul.f32 %v1838, 0.0078125
  %v1842 = vadd.f32 %v1840, 1e-05
  %v1843 = vadd.f32 %v1841, 1e-05
  %v1844 = vrsqrt.pop %v1842
  %v1845 = vrsqrt.pop %v1843
  %v1848 = vcombine.low %v1844, %v1845
  %v1850 = vunpack.c.l.s4 1966171168
  %v1851 = vunpack.c.0.s8 %v1850
  %v1852 = vlaneseq
  %v1853 = vshrl.u32 %v1852, 7
  %v1854 = vsub.s32 %v1851, %v1853
  %v1855 = vrot.slane %v1848, %v1854
  %v1857 = vunpack.c.l.s4 1966171168
  %v1858 = vunpack.c.0.s8 %v1857
  %v1859 = vlaneseq
  %v1860 = vshrl.u32 %v1859, 7
  %v1861 = vsub.s32 %v1858, %v1860
  %v1862 = vrot.slane %v1855, %v1861
  %v1864 = vmul.f32 %v1536, %v1862
  %v1866 = vlaneseq
  %v1867 = vshrl.u32 %v1866, 7
  %v1868 = vsub.s32 0, %v1867
  %v1869 = vrot.slane %v1864, %v1868
  %v1870 = vlaneseq
  %v1871 = vshrl.u32 %v1870, 7
  %v1872 = vsub.s32 1, %v1871
  %v1873 = vrot.slane %v1864, %v1872
  %v1876 = vmul.f32 %v1690, %v1869
  %v1877 = vmul.f32 %v1691, %v1873
  %v1878 = vmul.f32 %v1692, %v1869
  %v1879 = vmul.f32 %v1693, %v1873
  %v1881 = vlaneseq
  %v1882 = vshrl.u32 %v1881, 7
  %v1883 = vsub.s32 0, %v1882
  %v1884 = vrot.slane %v1537, %v1883
  %v1885 = vlaneseq
  %v1886 = vshrl.u32 %v1885, 7
  %v1887 = vsub.s32 1, %v1886
  %v1888 = vrot.slane %v1537, %v1887
  %v1891 = vadd.f32 %v1876, %v1884
  %v1892 = vadd.f32 %v1877, %v1888
  %v1893 = vadd.f32 %v1878, %v1884
  %v1894 = vadd.f32 %v1879, %v1888
  %v1895 = vadd.f32 %v1891, %v29
  %v1896 = vadd.f32 %v1892, %v30
  %v1897 = vadd.f32 %v1893, %v31
  %v1898 = vadd.f32 %v1894, %v32
  %v1899 = vmax.f32 %v1895, 0.0
  %v1900 = vmax.f32 %v1896, 0.0
  %v1901 = vmax.f32 %v1897, 0.0
  %v1902 = vmax.f32 %v1898, 0.0
  %1903 = vst [vmem:[%s8] sm:$0xff] %v1899
  %1904 = vst [vmem:[%s8 + $0x8] sm:$0xff] %v1900
  %1905 = vst [vmem:[%s8 + $0x10] sm:$0xff] %v1901
  %1906 = vst [vmem:[%s8 + $0x18] sm:$0xff] %v1902
  // Predicated region
  $region34: #{resblock_forward.1} parent=0 // pred_check
    _
  $region35: #{resblock_forward.1} parent=0 // pred_check_branch
    %1908 = sbr.rel (0) target = $region37
  $region36: #{resblock_forward.1} parent=0 // pred_region
    _
  $region37: #{resblock_forward.1} parent=0 // pred_fallthru
    _
  // Predicated region
  $region38: #{resblock_forward.1} parent=0 // pred_check
    _
  $region39: #{resblock_forward.1} parent=0 // pred_check_branch
    %1910 = sbr.rel (0) target = $region41
  $region40: #{resblock_forward.1} parent=0 // pred_region
    _
  $region41: #{resblock_forward.1} parent=0 // pred_fallthru
    _

</llo_original>
